<compile_context>
chip_gen: v7x
topology: tpu7x:2x2x1
jax: 0.10.0
libtpu: 0.0.40
codegen_flags: <defaults>
</compile_context>

<pallas_src>
import functools

import jax
import jax.numpy as jnp
from jax import lax
from jax.experimental import pallas as pl
from jax.experimental.pallas import tpu as pltpu


def _round_up(x: int, m: int) -> int:
    return ((x + m - 1) // m) * m


def _mlp_kernel(x_ref, w1_ref, b1_ref, w2_ref, b2_ref, w3_ref, b3_ref,
                o_ref, acc_ref, *, d_in: int, block_k: int):
    """One (TB, TK) step of  relu(x@w1+b1) -> relu(.@w2+b2) -> .@w3+b3.

    Grid = (batch blocks, K blocks).  Layer 1 is accumulated over the K axis
    into the f32 VMEM scratch `acc_ref`; bias+ReLU and layers 2/3 run once, on
    the last K step (standard pl.when init / finalize pattern).
    """
    k = pl.program_id(1)

    @pl.when(k == 0)
    def _init():
        acc_ref[...] = jnp.zeros_like(acc_ref)

    x = x_ref[...]
    w1 = w1_ref[...]
    if d_in % block_k != 0:
        # Last K block overhangs D_in: both operands hold unspecified values
        # there, so zero BOTH sides (0*0 == 0 even if the padding is NaN).
        col = k * block_k + lax.broadcasted_iota(jnp.int32, x.shape, 1)
        x = jnp.where(col < d_in, x, 0)
        row = k * block_k + lax.broadcasted_iota(jnp.int32, w1.shape, 0)
        w1 = jnp.where(row < d_in, w1, 0)

    # layer 1 partial product: (TB, TK) @ (TK, H1), f32 accumulation on MXU.
    acc_ref[...] += jnp.dot(x, w1, preferred_element_type=jnp.float32)

    @pl.when(k == pl.num_programs(1) - 1)
    def _finalize():
        # f32 bias + ReLU epilogue; activations cast to the matmul dtype only
        # for the (tiny) layer-2/3 MXU inputs.
        h1 = jnp.maximum(acc_ref[...] + b1_ref[...], 0.0).astype(w2_ref.dtype)
        h2 = jnp.dot(h1, w2_ref[...], preferred_element_type=jnp.float32)
        h2 = jnp.maximum(h2 + b2_ref[...], 0.0).astype(w3_ref.dtype)
        out = jnp.dot(h2, w3_ref[...], preferred_element_type=jnp.float32)
        o_ref[...] = (out + b3_ref[...]).astype(o_ref.dtype)


def simple_waveform_encoder(x, w1, b1, w2, b2, w3, b3, *,
                            block_rows: int = 1024,
                            max_block_k: int = 2048,
                            vmem_budget_bytes: int = 12 * 1024 * 1024,
                            out_dtype=None):
    """Fused Linear(64)->ReLU->Linear(32)->ReLU->Linear(latent) forward.

    x : (B, D_in).  Matmuls run in x.dtype (pass bf16 x to halve HBM reads;
        x is never cast in-kernel or in the wrapper).
    w*: (in, out) layout (transposed vs. torch nn.Linear.weight); pre-cast once
        to x.dtype in the wrapper.  b*: (out,), kept f32 for the epilogue.
    """
    B, d_in = x.shape
    h1_dim = w1.shape[1]
    h2_dim = w2.shape[1]
    latent = w3.shape[1]
    out_dtype = x.dtype if out_dtype is None else jnp.dtype(out_dtype)

    mm_dtype = x.dtype                       # matmul-input dtype follows x
    w1 = w1.astype(mm_dtype)
    w2 = w2.astype(mm_dtype)
    w3 = w3.astype(mm_dtype)
    b1_2d = b1.reshape(1, -1).astype(jnp.float32)
    b2_2d = b2.reshape(1, -1).astype(jnp.float32)
    b3_2d = b3.reshape(1, -1).astype(jnp.float32)

    # ---- D_in-aware tiling against a VMEM budget (default 12 MiB: fits v5e's
    # 16 MiB scoped default and everything newer).
    tk = min(_round_up(d_in, 128), max_block_k)          # K tile (lane multiple)
    nk = pl.cdiv(d_in, tk)

    x_bytes = jnp.dtype(mm_dtype).itemsize
    o_bytes = jnp.dtype(out_dtype).itemsize
    # Fixed cost: double-buffered K-varying w1 block + resident w2/w3/biases.
    fixed = 2 * tk * h1_dim * x_bytes
    fixed += 2 * ((h1_dim * h2_dim + h2_dim * latent) * x_bytes
                  + (h1_dim + h2_dim + latent) * 4)
    # Per batch-row: double-buffered x / out blocks + f32 acc + live h1/h2.
    per_row = 2 * tk * x_bytes + 2 * latent * o_bytes + (2 * h1_dim + h2_dim) * 4
    tb_budget = (vmem_budget_bytes - fixed - (1 << 20)) // per_row   # 1 MiB slack
    tb_budget = max(8, (tb_budget // 8) * 8)

    tb = min(block_rows, tb_budget, _round_up(B, 8))
    # Keep >= 2 batch-grid steps (v7x megacore + prefetch overlap) unless the
    # batch is tiny; large B / large D_in naturally gives many more steps.
    two_step_tb = _round_up(pl.cdiv(B, 2), 8)
    if two_step_tb >= 128:
        tb = min(tb, two_step_tb)
    tb = max(tb, 8)

    grid = (pl.cdiv(B, tb), nk)

    # Constant block index -> block stays resident in VMEM across the grid.
    resident = lambda a: pl.BlockSpec(a.shape, lambda i, k: (0, 0))

    kernel = functools.partial(_mlp_kernel, d_in=d_in, block_k=tk)

    return pl.pallas_call(
        kernel,
        out_shape=jax.ShapeDtypeStruct((B, latent), out_dtype),
        grid=grid,
        in_specs=[
            pl.BlockSpec((tb, tk), lambda i, k: (i, k)),      # x: batch x K tiled
            pl.BlockSpec((tk, h1_dim), lambda i, k: (k, 0)),  # w1: K tiled
            resident(b1_2d),
            resident(w2), resident(b2_2d),
            resident(w3), resident(b3_2d),
        ],
        # TODO(synk): latent=16 < 128 lanes leaves the output store lane-masked;
        # the (B,16)->(B//8,128) lane-dense repack needs an in-kernel
        # sublane->lane relayout whose Mosaic lowering isn't guaranteed, and at
        # realistic waveform D_in (thousands) writes are <10% of traffic, so it
        # is deferred.  bf16 out_dtype already halves the write bytes.
        out_specs=pl.BlockSpec((tb, latent), lambda i, k: (i, 0)),
        scratch_shapes=[pltpu.VMEM((tb, h1_dim), jnp.float32)],
        compiler_params=pltpu.CompilerParams(
            # Batch axis shards across v7x's two TensorCores; K is a reduction.
            dimension_semantics=("parallel", "arbitrary"),
            # Explicit limit: above v5e's 16 MiB default, == v6e/v7x defaults,
            # half of v7x's 64 MiB physical VMEM.
            vmem_limit_bytes=32 * 1024 * 1024,
        ),
    )(x, w1, b1_2d, w2, b2_2d, w3, b3_2d)


def _init_linear(key, fan_in, fan_out):
    """Deterministic PyTorch-style (kaiming-uniform-ish) init; (in,out) weight."""
    kw, kb = jax.random.split(key)
    bound = 1.0 / jnp.sqrt(fan_in)
    w = jax.random.uniform(kw, (fan_in, fan_out), jnp.float32, -bound, bound)
    b = jax.random.uniform(kb, (fan_out,), jnp.float32, -bound, bound)
    return w, b


def _ref_forward(x, w1, b1, w2, b2, w3, b3):
    h = jnp.maximum(x @ w1 + b1, 0.0)
    h = jnp.maximum(h @ w2 + b2, 0.0)
    return h @ w3 + b3


if __name__ == "__main__":
    key = jax.random.PRNGKey(0)
    k_x, k_x2, k1, k2, k3, k4 = jax.random.split(key, 6)

    # LazyLinear infers D_IN from x; small demo shapes.
    B, D_IN, H1, H2, LATENT = 512, 128, 64, 32, 16

    x = jax.random.normal(k_x, (B, D_IN), jnp.float32)
    w1, b1 = _init_linear(k1, D_IN, H1)
    w2, b2 = _init_linear(k2, H1, H2)
    w3, b3 = _init_linear(k3, H2, LATENT)
    ref = _ref_forward(x, w1, b1, w2, b2, w3, b3)

    # 1) default f32 path (single K block, >=2 batch blocks).
    out = jax.block_until_ready(
        simple_waveform_encoder(x, w1, b1, w2, b2, w3, b3))
    assert out.shape == (B, LATENT) and out.dtype == x.dtype
    assert jnp.allclose(out, ref, atol=1e-4, rtol=1e-4)

    # 2) ragged batch (B not a multiple of the row tile) -> clipped last block.
    out_rag = jax.block_until_ready(
        simple_waveform_encoder(x[:300], w1, b1, w2, b2, w3, b3))
    assert jnp.allclose(out_rag, ref[:300], atol=1e-4, rtol=1e-4)

    # 3) K-tiled path with a non-128-multiple D_in -> exercises the f32
    #    accumulator (pl.when init/finalize) and the K-overhang masking.
    D2 = 200
    x2 = jax.random.normal(k_x2, (384, D2), jnp.float32)
    w1b, b1b = _init_linear(k4, D2, H1)
    ref2 = _ref_forward(x2, w1b, b1b, w2, b2, w3, b3)
    out2 = jax.block_until_ready(
        simple_waveform_encoder(x2, w1b, b1b, w2, b2, w3, b3, max_block_k=128))
    assert jnp.allclose(out2, ref2, atol=1e-4, rtol=1e-4)

    # 4) bf16 x straight from "HBM" (halves read traffic; weights pre-cast in
    #    the wrapper, no in-kernel casts of x) with bf16 output (halves writes).
    out_bf16 = jax.block_until_ready(
        simple_waveform_encoder(x.astype(jnp.bfloat16), w1, b1, w2, b2, w3, b3,
                                out_dtype=jnp.bfloat16))
    assert out_bf16.dtype == jnp.bfloat16
    assert jnp.allclose(out_bf16.astype(jnp.float32), ref, atol=1.5e-1, rtol=5e-2)

    print("KERNEL_OK")
</pallas_src>

<mosaic_0001>
module attributes {stable_mosaic.version = 11 : i64} {
  func.func @_mlp_kernel(%arg0: i32, %arg1: i32, %arg2: memref<256x128xf32, #tpu.memory_space<vmem>>, %arg3: memref<128x64xf32, #tpu.memory_space<vmem>>, %arg4: memref<1x64xf32, #tpu.memory_space<vmem>>, %arg5: memref<64x32xf32, #tpu.memory_space<vmem>>, %arg6: memref<1x32xf32, #tpu.memory_space<vmem>>, %arg7: memref<32x16xf32, #tpu.memory_space<vmem>>, %arg8: memref<1x16xf32, #tpu.memory_space<vmem>>, %arg9: memref<256x16xf32, #tpu.memory_space<vmem>>, %arg10: memref<256x64xf32, #tpu.memory_space<vmem>>) attributes {dimension_semantics = [#tpu.dimension_semantics<parallel>, #tpu.dimension_semantics<arbitrary>], iteration_bounds = array<i64: 2, 1>, scalar_prefetch = 0 : i64, scratch_operands = 1 : i64, tpu.core_type = #tpu.core_type<tc>, window_params = [{transform_indices = @transform_0, window_bounds = array<i64: 256, 128>}, {transform_indices = @transform_1, window_bounds = array<i64: 128, 64>}, {pipeline_mode = #tpu.pipeline_mode<synchronous>, transform_indices = @transform_2, window_bounds = array<i64: 1, 64>}, {pipeline_mode = #tpu.pipeline_mode<synchronous>, transform_indices = @transform_3, window_bounds = array<i64: 64, 32>}, {pipeline_mode = #tpu.pipeline_mode<synchronous>, transform_indices = @transform_4, window_bounds = array<i64: 1, 32>}, {pipeline_mode = #tpu.pipeline_mode<synchronous>, transform_indices = @transform_5, window_bounds = array<i64: 32, 16>}, {pipeline_mode = #tpu.pipeline_mode<synchronous>, transform_indices = @transform_6, window_bounds = array<i64: 1, 16>}, {transform_indices = @transform_7, window_bounds = array<i64: 256, 16>}]} {
    %c0_i32 = arith.constant 0 : i32
    %0 = arith.cmpi eq, %arg1, %c0_i32 : i32
    %1 = arith.extui %0 : i1 to i32
    %c0_i32_0 = arith.constant 0 : i32
    %2 = arith.cmpi ne, %1, %c0_i32_0 : i32
    scf.if %2 {
      %cst_10 = arith.constant 0.000000e+00 : f32
      %12 = vector.broadcast %cst_10 : f32 to vector<256x64xf32>
      %c0_11 = arith.constant 0 : index
      %c0_12 = arith.constant 0 : index
      %13 = vector.load %arg10[%c0_11, %c0_12] : memref<256x64xf32, #tpu.memory_space<vmem>>, vector<256x64xf32>
      tpu.vector_store %arg10[%c0_11, %c0_12], %12 {strides = array<i32>} : memref<256x64xf32, #tpu.memory_space<vmem>>, vector<256x64xf32>,
    } else {
    }
    %c0 = arith.constant 0 : index
    %c0_1 = arith.constant 0 : index
    %3 = vector.load %arg2[%c0, %c0_1] : memref<256x128xf32, #tpu.memory_space<vmem>>, vector<256x128xf32>
    %c0_2 = arith.constant 0 : index
    %c0_3 = arith.constant 0 : index
    %4 = vector.load %arg3[%c0_2, %c0_3] : memref<128x64xf32, #tpu.memory_space<vmem>>, vector<128x64xf32>
    %c0_4 = arith.constant 0 : index
    %c0_5 = arith.constant 0 : index
    %5 = vector.load %arg10[%c0_4, %c0_5] : memref<256x64xf32, #tpu.memory_space<vmem>>, vector<256x64xf32>
    %cst = arith.constant dense<0.000000e+00> : vector<256x64xf32>
    %6 = tpu.matmul %3, %4, %cst {dimension_numbers = #tpu.dot_dimension_numbers<[1], [0], [0], [1], [0, 0, 1, 1], [], []>} : vector<256x128xf32>, vector<128x64xf32>, vector<256x64xf32> -> vector<256x64xf32>
    %7 = arith.addf %5, %6 : vector<256x64xf32>
    %c0_6 = arith.constant 0 : index
    %c0_7 = arith.constant 0 : index
    %8 = vector.load %arg10[%c0_6, %c0_7] : memref<256x64xf32, #tpu.memory_space<vmem>>, vector<256x64xf32>
    tpu.vector_store %arg10[%c0_6, %c0_7], %7 {strides = array<i32>} : memref<256x64xf32, #tpu.memory_space<vmem>>, vector<256x64xf32>,
    %c0_i32_8 = arith.constant 0 : i32
    %9 = arith.cmpi eq, %arg1, %c0_i32_8 : i32
    %10 = arith.extui %9 : i1 to i32
    %c0_i32_9 = arith.constant 0 : i32
    %11 = arith.cmpi ne, %10, %c0_i32_9 : i32
    scf.if %11 {
      %c0_10 = arith.constant 0 : index
      %c0_11 = arith.constant 0 : index
      %12 = vector.load %arg10[%c0_10, %c0_11] : memref<256x64xf32, #tpu.memory_space<vmem>>, vector<256x64xf32>
      %c0_12 = arith.constant 0 : index
      %c0_13 = arith.constant 0 : index
      %13 = vector.load %arg4[%c0_12, %c0_13] : memref<1x64xf32, #tpu.memory_space<vmem>>, vector<1x64xf32>
      %14 = vector.broadcast %13 : vector<1x64xf32> to vector<256x64xf32>
      %15 = arith.addf %12, %14 : vector<256x64xf32>
      %cst_14 = arith.constant 0.000000e+00 : f32
      %16 = vector.broadcast %cst_14 : f32 to vector<256x64xf32>
      %17 = arith.maximumf %15, %16 : vector<256x64xf32>
      %c0_15 = arith.constant 0 : index
      %c0_16 = arith.constant 0 : index
      %18 = vector.load %arg5[%c0_15, %c0_16] : memref<64x32xf32, #tpu.memory_space<vmem>>, vector<64x32xf32>
      %cst_17 = arith.constant dense<0.000000e+00> : vector<256x32xf32>
      %19 = tpu.matmul %17, %18, %cst_17 {dimension_numbers = #tpu.dot_dimension_numbers<[1], [0], [0], [1], [0, 0, 1, 1], [], []>} : vector<256x64xf32>, vector<64x32xf32>, vector<256x32xf32> -> vector<256x32xf32>
      %c0_18 = arith.constant 0 : index
      %c0_19 = arith.constant 0 : index
      %20 = vector.load %arg6[%c0_18, %c0_19] : memref<1x32xf32, #tpu.memory_space<vmem>>, vector<1x32xf32>
      %21 = vector.broadcast %20 : vector<1x32xf32> to vector<256x32xf32>
      %22 = arith.addf %19, %21 : vector<256x32xf32>
      %cst_20 = arith.constant 0.000000e+00 : f32
      %23 = vector.broadcast %cst_20 : f32 to vector<256x32xf32>
      %24 = arith.maximumf %22, %23 : vector<256x32xf32>
      %c0_21 = arith.constant 0 : index
      %c0_22 = arith.constant 0 : index
      %25 = vector.load %arg7[%c0_21, %c0_22] : memref<32x16xf32, #tpu.memory_space<vmem>>, vector<32x16xf32>
      %cst_23 = arith.constant dense<0.000000e+00> : vector<256x16xf32>
      %26 = tpu.matmul %24, %25, %cst_23 {dimension_numbers = #tpu.dot_dimension_numbers<[1], [0], [0], [1], [0, 0, 1, 1], [], []>} : vector<256x32xf32>, vector<32x16xf32>, vector<256x16xf32> -> vector<256x16xf32>
      %c0_24 = arith.constant 0 : index
      %c0_25 = arith.constant 0 : index
      %27 = vector.load %arg8[%c0_24, %c0_25] : memref<1x16xf32, #tpu.memory_space<vmem>>, vector<1x16xf32>
      %28 = vector.broadcast %27 : vector<1x16xf32> to vector<256x16xf32>
      %29 = arith.addf %26, %28 : vector<256x16xf32>
      %c0_26 = arith.constant 0 : index
      %c0_27 = arith.constant 0 : index
      %30 = vector.load %arg9[%c0_26, %c0_27] : memref<256x16xf32, #tpu.memory_space<vmem>>, vector<256x16xf32>
      tpu.vector_store %arg9[%c0_26, %c0_27], %29 {strides = array<i32>} : memref<256x16xf32, #tpu.memory_space<vmem>>, vector<256x16xf32>,
    } else {
    }
    return
  }
  func.func @transform_0(%arg0: i32, %arg1: i32) -> (i32, i32) {
    %c0_i32 = arith.constant 0 : i32
    return %arg0, %arg1 : i32, i32
  }
  func.func @transform_1(%arg0: i32, %arg1: i32) -> (i32, i32) {
    %c0_i32 = arith.constant 0 : i32
    %c0_i32_0 = arith.constant 0 : i32
    return %arg1, %c0_i32 : i32, i32
  }
  func.func @transform_2(%arg0: i32, %arg1: i32) -> (i32, i32) {
    %c0_i32 = arith.constant 0 : i32
    %c0_i32_0 = arith.constant 0 : i32
    %c0_i32_1 = arith.constant 0 : i32
    return %c0_i32, %c0_i32_0 : i32, i32
  }
  func.func @transform_3(%arg0: i32, %arg1: i32) -> (i32, i32) {
    %c0_i32 = arith.constant 0 : i32
    %c0_i32_0 = arith.constant 0 : i32
    %c0_i32_1 = arith.constant 0 : i32
    return %c0_i32, %c0_i32_0 : i32, i32
  }
  func.func @transform_4(%arg0: i32, %arg1: i32) -> (i32, i32) {
    %c0_i32 = arith.constant 0 : i32
    %c0_i32_0 = arith.constant 0 : i32
    %c0_i32_1 = arith.constant 0 : i32
    return %c0_i32, %c0_i32_0 : i32, i32
  }
  func.func @transform_5(%arg0: i32, %arg1: i32) -> (i32, i32) {
    %c0_i32 = arith.constant 0 : i32
    %c0_i32_0 = arith.constant 0 : i32
    %c0_i32_1 = arith.constant 0 : i32
    return %c0_i32, %c0_i32_0 : i32, i32
  }
  func.func @transform_6(%arg0: i32, %arg1: i32) -> (i32, i32) {
    %c0_i32 = arith.constant 0 : i32
    %c0_i32_0 = arith.constant 0 : i32
    %c0_i32_1 = arith.constant 0 : i32
    return %c0_i32, %c0_i32_0 : i32, i32
  }
  func.func @transform_7(%arg0: i32, %arg1: i32) -> (i32, i32) {
    %c0_i32 = arith.constant 0 : i32
    %c0_i32_0 = arith.constant 0 : i32
    return %arg0, %c0_i32 : i32, i32
  }
}

</mosaic_0001>

<llo_original>
// kernel: tpu_custom_call.1
$region0: #{tpu_custom_call.1}
  #allocation0 [shape = 'u32[]', space=smem, size = 0x4, offset = 0x4, fixed_abs, tag = 'smem constant byte address 0x4 - core index']
  #allocation1 [shape = 'u32[144,128]{1,0:T(1,128)}', space=vmem, size = 0x12000, scoped, tag = 'internal scratch']
  #allocation2 [shape = 'f32[256,64]{1,0:T(8,128)}', space=vmem, size = 0x20000, scoped, tag = 'scratch operand']
  %s0 = inlined_call_operand.hbm [shape: f32[512,128], index: 0, kind: input, shape index: {}]
  %s1 = inlined_call_operand.vmem [shape: f32[128,64], index: 1, kind: input, shape index: {}]
  %s2 = inlined_call_operand.vmem [shape: f32[1,64], index: 2, kind: input, shape index: {}]
  %s3 = inlined_call_operand.vmem [shape: f32[64,32], index: 3, kind: input, shape index: {}]
  %s4 = inlined_call_operand.vmem [shape: f32[1,32], index: 4, kind: input, shape index: {}]
  %s5 = inlined_call_operand.vmem [shape: f32[32,16], index: 5, kind: input, shape index: {}]
  %s6 = inlined_call_operand.vmem [shape: f32[1,16], index: 6, kind: input, shape index: {}]
  %s7 = inlined_call_operand.vmem [shape: f32[512,16], index: 7, kind: output, shape index: {}]
  %s8 = sld [smem:[#allocation0]]
  $region73: #{tpu_custom_call.1} parent=0
    _
  %s10 = ssub.s32 1, %s8
  %s11 = scalar_select 0, %s10, %s8
  $region1: #{tpu_custom_call.1} parent=0
    #allocation3 [shape = 'u8[262144]{0}', space=vmem, size = 0x40000, scoped, tag = 'input window, operand 0']
    #allocation4 [shape = 's32[2]{0}', space=sflag, size = 0x8, scoped, tag = 'scoped memory for tpu_custom_call.1']
    %12 = vsyncpa [#allocation4], 0
    %s13 = scalar_lea.sflag [#allocation4], 1
    %14 = vsyncpa %s13, 0
    loop: start=0, step=1, limit=4
    $region2: #{tpu_custom_call.1} parent=1 // loop_pre_header
      _
    $region3: #{tpu_custom_call.1} parent=1 // loop_header
      %s16 = sphi 0, %s20
      %p17 = scmp.ge.s32.totalorder %s16, 4
      %s23 = sphi 0, %s35
      %s24 = sphi 0, %s31
      %s25 = sphi 0, %s23
      %s26 = sphi 0, %s24
      %s27 = sphi 0, %s25
      %s28 = sphi 0, %s26
      %s40 = sphi 0, %s42
      %s43 = sphi 0, %s40
      %s44 = sphi 0, %s43
      %s60 = sphi 0, %s44
      %s66 = sphi 0, %s68
      %s69 = sphi 0, %s66
      %s70 = sphi 0, %s69
      %s86 = sphi 0, %s70
      %s90 = sphi 0, %s90
      %s92 = sphi 0, %s90
      %s93 = sphi 0, %s92
      %s107 = sphi 0, %s93
      %s111 = sphi 0, %s111
      %s113 = sphi 0, %s111
      %s114 = sphi 0, %s113
      %s128 = sphi 0, %s114
      %s132 = sphi 0, %s132
      %s134 = sphi 0, %s132
      %s135 = sphi 0, %s134
      %s149 = sphi 0, %s135
      %s153 = sphi 0, %s153
      %s155 = sphi 0, %s153
      %s156 = sphi 0, %s155
      %s170 = sphi 0, %s156
      %s174 = sphi 0, %s174
      %s176 = sphi 0, %s174
      %s177 = sphi 0, %s176
      %s191 = sphi 0, %s177
      %s197 = sphi 0, %s199
      %s200 = sphi 0, %s197
      %s201 = sphi 0, %s200
      %s217 = sphi 0, %s201
    $region4: #{tpu_custom_call.1} parent=1 // loop_header_branch
      %19 = sbr.rel (%p17) target = $region8
    $region5: #{tpu_custom_call.1} parent=1 // loop_body
      %s21 = ssub.s32 %s16, 1
      %s22 = ssub.s32 %s16, 2
      %s29 = sadd.s32 1, %s24
      %p30 = scmp.ge.s32.totalorder %s29, 1
      %s31 = scalar_select %p30, 0, %s29
      %s32 = sadd.s32 1, %s23
      %s33 = scalar_select %p30, %s32, %s23
      %p34 = scmp.ge.s32.totalorder %s33, 2
      %s35 = scalar_select %p34, 0, %s33
      %s36 = ssub.s32 %s23, %s35
      %s37 = ssub.s32 %s24, %s31
      %s38 = sor.u32 %s36, %s37
      %p39 = scmp.eq.s32.totalorder %s38, 0
      %s41 = sadd.s32 %s40, 1
      %s42 = scalar_select %p39, %s40, %s41
      %p45 = pneg %p39
      %p46 = scmp.eq.s32.totalorder %s16, 1
      %p47 = por %p45, %p46
      %p48 = scmp.ne.s32.totalorder %s40, %s43
      %p49 = scmp.eq.s32.totalorder %s16, 0
      %p50 = por %p48, %p49
      %p51 = scmp.ne.s32.totalorder %s40, %s43
      %p52 = scmp.eq.s32.totalorder %s21, 1
      %p53 = por %p51, %p52
      %p54 = scmp.ne.s32.totalorder %s43, %s44
      %p55 = scmp.eq.s32.totalorder %s21, 0
      %p56 = por %p54, %p55
      %p57 = scmp.ne.s32.totalorder %s43, %s44
      %p58 = scmp.eq.s32.totalorder %s22, 1
      %p59 = por %p57, %p58
      %p61 = scmp.ne.s32.totalorder %s44, %s60
      %p62 = scmp.eq.s32.totalorder %s22, 0
      %p63 = por %p61, %p62
      %s64 = ssub.s32 %s24, %s31
      %p65 = scmp.eq.s32.totalorder %s64, 0
      %s67 = sadd.s32 %s66, 1
      %s68 = scalar_select %p65, %s66, %s67
      %p71 = pneg %p65
      %p72 = scmp.eq.s32.totalorder %s16, 1
      %p73 = por %p71, %p72
      %p74 = scmp.ne.s32.totalorder %s66, %s69
      %p75 = scmp.eq.s32.totalorder %s16, 0
      %p76 = por %p74, %p75
      %p77 = scmp.ne.s32.totalorder %s66, %s69
      %p78 = scmp.eq.s32.totalorder %s21, 1
      %p79 = por %p77, %p78
      %p80 = scmp.ne.s32.totalorder %s69, %s70
      %p81 = scmp.eq.s32.totalorder %s21, 0
      %p82 = por %p80, %p81
      %p83 = scmp.ne.s32.totalorder %s69, %s70
      %p84 = scmp.eq.s32.totalorder %s22, 1
      %p85 = por %p83, %p84
      %p87 = scmp.ne.s32.totalorder %s70, %s86
      %p88 = scmp.eq.s32.totalorder %s22, 0
      %p89 = por %p87, %p88
      %s91 = sadd.s32 %s90, 1
      %p94 = scmp.eq.s32.totalorder %s16, 1
      %p95 = scmp.ne.s32.totalorder %s90, %s92
      %p96 = scmp.eq.s32.totalorder %s16, 0
      %p97 = por %p95, %p96
      %p98 = scmp.ne.s32.totalorder %s90, %s92
      %p99 = scmp.eq.s32.totalorder %s21, 1
      %p100 = por %p98, %p99
      %p101 = scmp.ne.s32.totalorder %s92, %s93
      %p102 = scmp.eq.s32.totalorder %s21, 0
      %p103 = por %p101, %p102
      %p104 = scmp.ne.s32.totalorder %s92, %s93
      %p105 = scmp.eq.s32.totalorder %s22, 1
      %p106 = por %p104, %p105
      %p108 = scmp.ne.s32.totalorder %s93, %s107
      %p109 = scmp.eq.s32.totalorder %s22, 0
      %p110 = por %p108, %p109
      %s112 = sadd.s32 %s111, 1
      %p115 = scmp.eq.s32.totalorder %s16, 1
      %p116 = scmp.ne.s32.totalorder %s111, %s113
      %p117 = scmp.eq.s32.totalorder %s16, 0
      %p118 = por %p116, %p117
      %p119 = scmp.ne.s32.totalorder %s111, %s113
      %p120 = scmp.eq.s32.totalorder %s21, 1
      %p121 = por %p119, %p120
      %p122 = scmp.ne.s32.totalorder %s113, %s114
      %p123 = scmp.eq.s32.totalorder %s21, 0
      %p124 = por %p122, %p123
      %p125 = scmp.ne.s32.totalorder %s113, %s114
      %p126 = scmp.eq.s32.totalorder %s22, 1
      %p127 = por %p125, %p126
      %p129 = scmp.ne.s32.totalorder %s114, %s128
      %p130 = scmp.eq.s32.totalorder %s22, 0
      %p131 = por %p129, %p130
      %s133 = sadd.s32 %s132, 1
      %p136 = scmp.eq.s32.totalorder %s16, 1
      %p137 = scmp.ne.s32.totalorder %s132, %s134
      %p138 = scmp.eq.s32.totalorder %s16, 0
      %p139 = por %p137, %p138
      %p140 = scmp.ne.s32.totalorder %s132, %s134
      %p141 = scmp.eq.s32.totalorder %s21, 1
      %p142 = por %p140, %p141
      %p143 = scmp.ne.s32.totalorder %s134, %s135
      %p144 = scmp.eq.s32.totalorder %s21, 0
      %p145 = por %p143, %p144
      %p146 = scmp.ne.s32.totalorder %s134, %s135
      %p147 = scmp.eq.s32.totalorder %s22, 1
      %p148 = por %p146, %p147
      %p150 = scmp.ne.s32.totalorder %s135, %s149
      %p151 = scmp.eq.s32.totalorder %s22, 0
      %p152 = por %p150, %p151
      %s154 = sadd.s32 %s153, 1
      %p157 = scmp.eq.s32.totalorder %s16, 1
      %p158 = scmp.ne.s32.totalorder %s153, %s155
      %p159 = scmp.eq.s32.totalorder %s16, 0
      %p160 = por %p158, %p159
      %p161 = scmp.ne.s32.totalorder %s153, %s155
      %p162 = scmp.eq.s32.totalorder %s21, 1
      %p163 = por %p161, %p162
      %p164 = scmp.ne.s32.totalorder %s155, %s156
      %p165 = scmp.eq.s32.totalorder %s21, 0
      %p166 = por %p164, %p165
      %p167 = scmp.ne.s32.totalorder %s155, %s156
      %p168 = scmp.eq.s32.totalorder %s22, 1
      %p169 = por %p167, %p168
      %p171 = scmp.ne.s32.totalorder %s156, %s170
      %p172 = scmp.eq.s32.totalorder %s22, 0
      %p173 = por %p171, %p172
      %s175 = sadd.s32 %s174, 1
      %p178 = scmp.eq.s32.totalorder %s16, 1
      %p179 = scmp.ne.s32.totalorder %s174, %s176
      %p180 = scmp.eq.s32.totalorder %s16, 0
      %p181 = por %p179, %p180
      %p182 = scmp.ne.s32.totalorder %s174, %s176
      %p183 = scmp.eq.s32.totalorder %s21, 1
      %p184 = por %p182, %p183
      %p185 = scmp.ne.s32.totalorder %s176, %s177
      %p186 = scmp.eq.s32.totalorder %s21, 0
      %p187 = por %p185, %p186
      %p188 = scmp.ne.s32.totalorder %s176, %s177
      %p189 = scmp.eq.s32.totalorder %s22, 1
      %p190 = por %p188, %p189
      %p192 = scmp.ne.s32.totalorder %s177, %s191
      %p193 = scmp.eq.s32.totalorder %s22, 0
      %p194 = por %p192, %p193
      %s195 = ssub.s32 %s23, %s35
      %p196 = scmp.eq.s32.totalorder %s195, 0
      %s198 = sadd.s32 %s197, 1
      %s199 = scalar_select %p196, %s197, %s198
      %p202 = pneg %p196
      %p203 = scmp.eq.s32.totalorder %s16, 1
      %p204 = por %p202, %p203
      %p205 = scmp.ne.s32.totalorder %s197, %s200
      %p206 = scmp.eq.s32.totalorder %s16, 0
      %p207 = por %p205, %p206
      %p208 = scmp.ne.s32.totalorder %s197, %s200
      %p209 = scmp.eq.s32.totalorder %s21, 1
      %p210 = por %p208, %p209
      %p211 = scmp.ne.s32.totalorder %s200, %s201
      %p212 = scmp.eq.s32.totalorder %s21, 0
      %p213 = por %p211, %p212
      %p214 = scmp.ne.s32.totalorder %s200, %s201
      %p215 = scmp.eq.s32.totalorder %s22, 1
      %p216 = por %p214, %p215
      %p218 = scmp.ne.s32.totalorder %s201, %s217
      %p219 = scmp.eq.s32.totalorder %s22, 0
      %p220 = por %p218, %p219
      %p221 = scmp.le.s32.totalorder 1, %s16
      %p222 = scmp.lt.s32.totalorder %s16, 3
      %p223 = pnand %p221, %p222
      %p224 = pneg %p223
      // Predicated region
      $region9: #{tpu_custom_call.1} parent=5 // pred_check
        _
      $region10: #{tpu_custom_call.1} parent=5 // pred_check_branch
        %226 = sbr.rel (%p223) target = $region12
      $region11: #{tpu_custom_call.1} parent=5 // pred_region
        %s227 = ssub.s32 %s16, 1
        // Predicated region
        $region13: #{tpu_custom_call.1} parent=11 // pred_check
          %p228 = pneg %p82
        $region14: #{tpu_custom_call.1} parent=11 // pred_check_branch
          %230 = sbr.rel (%p228) target = $region16
        $region15: #{tpu_custom_call.1} parent=11 // pred_region
          %s231 = smul.u32 16, %s26
          %p232 = scmp.lt.s32.totalorder %s231, 15
          %s233 = scalar_select %p232, %s231, 15
          %s234 = smul.addr %s233, 8
          %s235 = scalar_lea.vmem %s1, %s234
          %s236 = smul.u32 16, %s26
        $region16: #{tpu_custom_call.1} parent=11 // pred_fallthru
          _
        // Predicated region
        $region17: #{tpu_custom_call.1} parent=11 // pred_check
          %p237 = pneg %p103
        $region18: #{tpu_custom_call.1} parent=11 // pred_check_branch
          %239 = sbr.rel (%p237) target = $region20
        $region19: #{tpu_custom_call.1} parent=11 // pred_region
          _
        $region20: #{tpu_custom_call.1} parent=11 // pred_fallthru
          _
        // Predicated region
        $region21: #{tpu_custom_call.1} parent=11 // pred_check
          %p240 = pneg %p124
        $region22: #{tpu_custom_call.1} parent=11 // pred_check_branch
          %242 = sbr.rel (%p240) target = $region24
        $region23: #{tpu_custom_call.1} parent=11 // pred_region
          _
        $region24: #{tpu_custom_call.1} parent=11 // pred_fallthru
          _
        // Predicated region
        $region25: #{tpu_custom_call.1} parent=11 // pred_check
          %p243 = pneg %p145
        $region26: #{tpu_custom_call.1} parent=11 // pred_check_branch
          %245 = sbr.rel (%p243) target = $region28
        $region27: #{tpu_custom_call.1} parent=11 // pred_region
          _
        $region28: #{tpu_custom_call.1} parent=11 // pred_fallthru
          _
        // Predicated region
        $region29: #{tpu_custom_call.1} parent=11 // pred_check
          %p246 = pneg %p166
        $region30: #{tpu_custom_call.1} parent=11 // pred_check_branch
          %248 = sbr.rel (%p246) target = $region32
        $region31: #{tpu_custom_call.1} parent=11 // pred_region
          _
        $region32: #{tpu_custom_call.1} parent=11 // pred_fallthru
          _
        // Predicated region
        $region33: #{tpu_custom_call.1} parent=11 // pred_check
          %p249 = pneg %p187
        $region34: #{tpu_custom_call.1} parent=11 // pred_check_branch
          %251 = sbr.rel (%p249) target = $region36
        $region35: #{tpu_custom_call.1} parent=11 // pred_region
          _
        $region36: #{tpu_custom_call.1} parent=11 // pred_fallthru
          _
      $region12: #{tpu_custom_call.1} parent=5 // pred_fallthru
        _
      %p252 = scmp.lt.s32.totalorder %s16, 2
      // Predicated region
      $region37: #{tpu_custom_call.1} parent=5 // pred_check
        %p253 = pneg %p252
      $region38: #{tpu_custom_call.1} parent=5 // pred_check_branch
        %255 = sbr.rel (%p253) target = $region40
      $region39: #{tpu_custom_call.1} parent=5 // pred_region
        // Predicated region
        $region41: #{tpu_custom_call.1} parent=39 // pred_check
          %p256 = pneg %p50
        $region42: #{tpu_custom_call.1} parent=39 // pred_check_branch
          %258 = sbr.rel (%p256) target = $region44
        $region43: #{tpu_custom_call.1} parent=39 // pred_region
          %s259 = sand.u32 %s40, 1
          %s260 = scalar_lea.sflag [#allocation4], %s259
          %s261 = sand.u32 %s40, 1
          %s262 = smul.addr %s261, 256
          %s263 = scalar_lea.vmem [#allocation3], %s262
          %s264 = smul.u32 32, %s23
          %s266 = ssub.s32 4096, 4096
          %267 = vsyncadd %s260, %s266
          %s268 = sadd.s32 %s24, %s264
          %s269 = smul.addr %s268, 128
          %s270 = scalar_lea.hbm %s0, %s269
          %s271 = sshll.u32 %s263, 4
          %s272 = int_to_ptr.vmem [resolvable:$true] %s271
          %277 = dma.hbm_to_vmem [thread:$0]  %s270, 4096, %s272, %s260, 128, 128, 8
        $region44: #{tpu_custom_call.1} parent=39 // pred_fallthru
          _
      $region40: #{tpu_custom_call.1} parent=5 // pred_fallthru
        _
      %p278 = scmp.le.s32.totalorder 1, %s16
      %p279 = scmp.lt.s32.totalorder %s16, 3
      %p280 = pnand %p278, %p279
      %p281 = pneg %p280
      // Predicated region
      $region45: #{tpu_custom_call.1} parent=5 // pred_check
        _
      $region46: #{tpu_custom_call.1} parent=5 // pred_check_branch
        %283 = sbr.rel (%p280) target = $region48
      $region47: #{tpu_custom_call.1} parent=5 // pred_region
        %s284 = ssub.s32 %s16, 1
        %s285 = sand.u32 %s43, 1
        %s286 = scalar_lea.sflag [#allocation4], %s285
        %s287 = sand.u32 %s43, 1
        %s288 = smul.addr %s287, 256
        %s289 = scalar_lea.vmem [#allocation3], %s288
        // Predicated region
        $region49: #{tpu_custom_call.1} parent=47 // pred_check
          %p290 = pneg %p56
        $region50: #{tpu_custom_call.1} parent=47 // pred_check_branch
          %292 = sbr.rel (%p290) target = $region52
        $region51: #{tpu_custom_call.1} parent=47 // pred_region
          %293 = dma.done %s286, 4096
        $region52: #{tpu_custom_call.1} parent=47 // pred_fallthru
          _
        %s294 = sand.u32 %s43, 1
        %s295 = scalar_lea.sflag [#allocation4], %s294
        %s296 = sand.u32 %s43, 1
        %s297 = smul.addr %s296, 256
        %s298 = scalar_lea.vmem [#allocation3], %s297
        %p299 = pneg %p56
        %p300 = pneg %p53
        %s301 = smul.u32 16, %s26
        %p302 = scmp.lt.s32.totalorder %s301, 15
        %s303 = scalar_select %p302, %s301, 15
        %s304 = smul.addr %s303, 8
        %s305 = scalar_lea.vmem %s1, %s304
        %p306 = pneg %p82
        %p307 = pneg %p79
        %p308 = pneg %p103
        %p309 = pneg %p100
        %p310 = pneg %p124
        %p311 = pneg %p121
        %p312 = pneg %p145
        %p313 = pneg %p142
        %p314 = pneg %p166
        %p315 = pneg %p163
        %p316 = pneg %p187
        %p317 = pneg %p184
        %p318 = pneg %p213
        %p319 = pneg %p210
        %s320 = smul.u32 32, %s25
        %p321 = scmp.lt.s32.totalorder %s320, 63
        %s322 = scalar_select %p321, %s320, 63
        %s323 = smul.addr %s322, 8
        %s324 = scalar_lea.vmem %s7, %s323
        %s325 = smul.u32 32, %s25
        %s326 = smul.u32 16, %s26
        %p327 = scmp.lt.s32.totalorder %s326, 15
        %s328 = scalar_select %p327, %s326, 15
        %s329 = smul.addr %s328, 8
        %s330 = scalar_lea.vmem %s1, %s329
        %s331 = smul.u32 16, %s26
        %s332 = smul.u32 32, %s25
        %p333 = scmp.lt.s32.totalorder %s332, 63
        %s334 = scalar_select %p333, %s332, 63
        %s335 = smul.addr %s334, 8
        %s336 = scalar_lea.vmem %s7, %s335
        %s337 = smul.u32 32, %s25
        %p338 = scmp.eq.s32.totalorder %s26, 0
        // Predicated region
        $region53: #{tpu_custom_call.1} parent=47 // pred_check
          %p339 = pneg %p338
        $region54: #{tpu_custom_call.1} parent=47 // pred_check_branch
          %341 = sbr.rel (%p339) target = $region56
        $region55: #{tpu_custom_call.1} parent=47 // pred_region
          %vm342 = vcmask 523264
          %343 = vst.msk [vmem:[#allocation2] sm:$0xff] %vm342, 0.0
          %344 = vst.msk [vmem:[#allocation2 + $0x8] sm:$0xff] %vm342, 0.0
          %345 = vst.msk [vmem:[#allocation2 + $0x10] sm:$0xff] %vm342, 0.0
          %346 = vst.msk [vmem:[#allocation2 + $0x18] sm:$0xff] %vm342, 0.0
          %347 = vst.msk [vmem:[#allocation2 + $0x20] sm:$0xff] %vm342, 0.0
          %348 = vst.msk [vmem:[#allocation2 + $0x28] sm:$0xff] %vm342, 0.0
          %349 = vst.msk [vmem:[#allocation2 + $0x30] sm:$0xff] %vm342, 0.0
          %350 = vst.msk [vmem:[#allocation2 + $0x38] sm:$0xff] %vm342, 0.0
          %351 = vst.msk [vmem:[#allocation2 + $0x40] sm:$0xff] %vm342, 0.0
          %352 = vst.msk [vmem:[#allocation2 + $0x48] sm:$0xff] %vm342, 0.0
          %353 = vst.msk [vmem:[#allocation2 + $0x50] sm:$0xff] %vm342, 0.0
          %354 = vst.msk [vmem:[#allocation2 + $0x58] sm:$0xff] %vm342, 0.0
          %355 = vst.msk [vmem:[#allocation2 + $0x60] sm:$0xff] %vm342, 0.0
          %356 = vst.msk [vmem:[#allocation2 + $0x68] sm:$0xff] %vm342, 0.0
          %357 = vst.msk [vmem:[#allocation2 + $0x70] sm:$0xff] %vm342, 0.0
          %358 = vst.msk [vmem:[#allocation2 + $0x78] sm:$0xff] %vm342, 0.0
          %359 = vst.msk [vmem:[#allocation2 + $0x80] sm:$0xff] %vm342, 0.0
          %360 = vst.msk [vmem:[#allocation2 + $0x88] sm:$0xff] %vm342, 0.0
          %361 = vst.msk [vmem:[#allocation2 + $0x90] sm:$0xff] %vm342, 0.0
          %362 = vst.msk [vmem:[#allocation2 + $0x98] sm:$0xff] %vm342, 0.0
          %363 = vst.msk [vmem:[#allocation2 + $0xa0] sm:$0xff] %vm342, 0.0
          %364 = vst.msk [vmem:[#allocation2 + $0xa8] sm:$0xff] %vm342, 0.0
          %365 = vst.msk [vmem:[#allocation2 + $0xb0] sm:$0xff] %vm342, 0.0
          %366 = vst.msk [vmem:[#allocation2 + $0xb8] sm:$0xff] %vm342, 0.0
          %367 = vst.msk [vmem:[#allocation2 + $0xc0] sm:$0xff] %vm342, 0.0
          %368 = vst.msk [vmem:[#allocation2 + $0xc8] sm:$0xff] %vm342, 0.0
          %369 = vst.msk [vmem:[#allocation2 + $0xd0] sm:$0xff] %vm342, 0.0
          %370 = vst.msk [vmem:[#allocation2 + $0xd8] sm:$0xff] %vm342, 0.0
          %371 = vst.msk [vmem:[#allocation2 + $0xe0] sm:$0xff] %vm342, 0.0
          %372 = vst.msk [vmem:[#allocation2 + $0xe8] sm:$0xff] %vm342, 0.0
          %373 = vst.msk [vmem:[#allocation2 + $0xf0] sm:$0xff] %vm342, 0.0
          %374 = vst.msk [vmem:[#allocation2 + $0xf8] sm:$0xff] %vm342, 0.0
        $region56: #{tpu_custom_call.1} parent=47 // pred_fallthru
          _
        %v375 = vld [vmem:[%s289] sm:$0xff]
        %v376 = vld [vmem:[%s289 + $0x8] sm:$0xff]
        %v377 = vld [vmem:[%s289 + $0x10] sm:$0xff]
        %v378 = vld [vmem:[%s289 + $0x18] sm:$0xff]
        %v379 = vld [vmem:[%s289 + $0x20] sm:$0xff]
        %v380 = vld [vmem:[%s289 + $0x28] sm:$0xff]
        %v381 = vld [vmem:[%s289 + $0x30] sm:$0xff]
        %v382 = vld [vmem:[%s289 + $0x38] sm:$0xff]
        %v383 = vld [vmem:[%s289 + $0x40] sm:$0xff]
        %v384 = vld [vmem:[%s289 + $0x48] sm:$0xff]
        %v385 = vld [vmem:[%s289 + $0x50] sm:$0xff]
        %v386 = vld [vmem:[%s289 + $0x58] sm:$0xff]
        %v387 = vld [vmem:[%s289 + $0x60] sm:$0xff]
        %v388 = vld [vmem:[%s289 + $0x68] sm:$0xff]
        %v389 = vld [vmem:[%s289 + $0x70] sm:$0xff]
        %v390 = vld [vmem:[%s289 + $0x78] sm:$0xff]
        %v391 = vld [vmem:[%s289 + $0x80] sm:$0xff]
        %v392 = vld [vmem:[%s289 + $0x88] sm:$0xff]
        %v393 = vld [vmem:[%s289 + $0x90] sm:$0xff]
        %v394 = vld [vmem:[%s289 + $0x98] sm:$0xff]
        %v395 = vld [vmem:[%s289 + $0xa0] sm:$0xff]
        %v396 = vld [vmem:[%s289 + $0xa8] sm:$0xff]
        %v397 = vld [vmem:[%s289 + $0xb0] sm:$0xff]
        %v398 = vld [vmem:[%s289 + $0xb8] sm:$0xff]
        %v399 = vld [vmem:[%s289 + $0xc0] sm:$0xff]
        %v400 = vld [vmem:[%s289 + $0xc8] sm:$0xff]
        %v401 = vld [vmem:[%s289 + $0xd0] sm:$0xff]
        %v402 = vld [vmem:[%s289 + $0xd8] sm:$0xff]
        %v403 = vld [vmem:[%s289 + $0xe0] sm:$0xff]
        %v404 = vld [vmem:[%s289 + $0xe8] sm:$0xff]
        %v405 = vld [vmem:[%s289 + $0xf0] sm:$0xff]
        %v406 = vld [vmem:[%s289 + $0xf8] sm:$0xff]
        %v407 = vld [vmem:[%s330] sm:$0xff]
        %v408 = vld [vmem:[%s330 + $0x8] sm:$0xff]
        %v409 = vld [vmem:[%s330 + $0x10] sm:$0xff]
        %v410 = vld [vmem:[%s330 + $0x18] sm:$0xff]
        %v411 = vld [vmem:[%s330 + $0x20] sm:$0xff]
        %v412 = vld [vmem:[%s330 + $0x28] sm:$0xff]
        %v413 = vld [vmem:[%s330 + $0x30] sm:$0xff]
        %v414 = vld [vmem:[%s330 + $0x38] sm:$0xff]
        %v415 = vld [vmem:[%s330 + $0x40] sm:$0xff]
        %v416 = vld [vmem:[%s330 + $0x48] sm:$0xff]
        %v417 = vld [vmem:[%s330 + $0x50] sm:$0xff]
        %v418 = vld [vmem:[%s330 + $0x58] sm:$0xff]
        %v419 = vld [vmem:[%s330 + $0x60] sm:$0xff]
        %v420 = vld [vmem:[%s330 + $0x68] sm:$0xff]
        %v421 = vld [vmem:[%s330 + $0x70] sm:$0xff]
        %v422 = vld [vmem:[%s330 + $0x78] sm:$0xff]
        %v423 = vld [vmem:[#allocation2] sm:$0xff]
        %v424 = vld [vmem:[#allocation2 + $0x8] sm:$0xff]
        %v425 = vld [vmem:[#allocation2 + $0x10] sm:$0xff]
        %v426 = vld [vmem:[#allocation2 + $0x18] sm:$0xff]
        %v427 = vld [vmem:[#allocation2 + $0x20] sm:$0xff]
        %v428 = vld [vmem:[#allocation2 + $0x28] sm:$0xff]
        %v429 = vld [vmem:[#allocation2 + $0x30] sm:$0xff]
        %v430 = vld [vmem:[#allocation2 + $0x38] sm:$0xff]
        %v431 = vld [vmem:[#allocation2 + $0x40] sm:$0xff]
        %v432 = vld [vmem:[#allocation2 + $0x48] sm:$0xff]
        %v433 = vld [vmem:[#allocation2 + $0x50] sm:$0xff]
        %v434 = vld [vmem:[#allocation2 + $0x58] sm:$0xff]
        %v435 = vld [vmem:[#allocation2 + $0x60] sm:$0xff]
        %v436 = vld [vmem:[#allocation2 + $0x68] sm:$0xff]
        %v437 = vld [vmem:[#allocation2 + $0x70] sm:$0xff]
        %v438 = vld [vmem:[#allocation2 + $0x78] sm:$0xff]
        %v439 = vld [vmem:[#allocation2 + $0x80] sm:$0xff]
        %v440 = vld [vmem:[#allocation2 + $0x88] sm:$0xff]
        %v441 = vld [vmem:[#allocation2 + $0x90] sm:$0xff]
        %v442 = vld [vmem:[#allocation2 + $0x98] sm:$0xff]
        %v443 = vld [vmem:[#allocation2 + $0xa0] sm:$0xff]
        %v444 = vld [vmem:[#allocation2 + $0xa8] sm:$0xff]
        %v445 = vld [vmem:[#allocation2 + $0xb0] sm:$0xff]
        %v446 = vld [vmem:[#allocation2 + $0xb8] sm:$0xff]
        %v447 = vld [vmem:[#allocation2 + $0xc0] sm:$0xff]
        %v448 = vld [vmem:[#allocation2 + $0xc8] sm:$0xff]
        %v449 = vld [vmem:[#allocation2 + $0xd0] sm:$0xff]
        %v450 = vld [vmem:[#allocation2 + $0xd8] sm:$0xff]
        %v451 = vld [vmem:[#allocation2 + $0xe0] sm:$0xff]
        %v452 = vld [vmem:[#allocation2 + $0xe8] sm:$0xff]
        %v453 = vld [vmem:[#allocation2 + $0xf0] sm:$0xff]
        %v454 = vld [vmem:[#allocation2 + $0xf8] sm:$0xff]
        %455 = vmatprep.subr.mxu0 0.0
        %456 = vmatpush1.msra.mxu0 %v407
        %457 = vmatprep.subr.mxu0 0.0
        %458 = vmatpush1.msra.mxu0 %v408
        %459 = vmatprep.subr.mxu0 0.0
        %460 = vmatpush1.msra.mxu0 %v409
        %461 = vmatprep.subr.mxu0 0.0
        %462 = vmatpush1.msra.mxu0 %v410
        %463 = vmatprep.subr.mxu0 0.0
        %464 = vmatpush1.msra.mxu0 %v411
        %465 = vmatprep.subr.mxu0 0.0
        %466 = vmatpush1.msra.mxu0 %v412
        %467 = vmatprep.subr.mxu0 0.0
        %468 = vmatpush1.msra.mxu0 %v413
        %469 = vmatprep.subr.mxu0 0.0
        %470 = vmatpush1.msra.mxu0 %v414
        %471 = vmatprep.subr.mxu0 0.0
        %472 = vmatpush1.msra.mxu0 %v415
        %473 = vmatprep.subr.mxu0 0.0
        %474 = vmatpush1.msra.mxu0 %v416
        %475 = vmatprep.subr.mxu0 0.0
        %476 = vmatpush1.msra.mxu0 %v417
        %477 = vmatprep.subr.mxu0 0.0
        %478 = vmatpush1.msra.mxu0 %v418
        %479 = vmatprep.subr.mxu0 0.0
        %480 = vmatpush1.msra.mxu0 %v419
        %481 = vmatprep.subr.mxu0 0.0
        %482 = vmatpush1.msra.mxu0 %v420
        %483 = vmatprep.subr.mxu0 0.0
        %484 = vmatpush1.msra.mxu0 %v421
        %485 = vmatprep.subr.mxu0 0.0
        %486 = vmatpush1.msra.mxu0 %v422
        %487 = vmatprep.subr.mxu0 0.0
        %488 = vmatpush1.msra.mxu0 0.0
        %489 = vmatprep.subr.mxu0 0.0
        %490 = vmatpush1.msra.mxu0 0.0
        %491 = vmatprep.subr.mxu0 0.0
        %492 = vmatpush1.msra.mxu0 0.0
        %493 = vmatprep.subr.mxu0 0.0
        %494 = vmatpush1.msra.mxu0 0.0
        %495 = vmatprep.subr.mxu0 0.0
        %496 = vmatpush1.msra.mxu0 0.0
        %497 = vmatprep.subr.mxu0 0.0
        %498 = vmatpush1.msra.mxu0 0.0
        %499 = vmatprep.subr.mxu0 0.0
        %500 = vmatpush1.msra.mxu0 0.0
        %501 = vmatprep.subr.mxu0 0.0
        %502 = vmatpush1.msra.mxu0 0.0
        %503 = vmatprep.subr.mxu0 0.0
        %504 = vmatpush1.msra.mxu0 0.0
        %505 = vmatprep.subr.mxu0 0.0
        %506 = vmatpush1.msra.mxu0 0.0
        %507 = vmatprep.subr.mxu0 0.0
        %508 = vmatpush1.msra.mxu0 0.0
        %509 = vmatprep.subr.mxu0 0.0
        %510 = vmatpush1.msra.mxu0 0.0
        %511 = vmatprep.subr.mxu0 0.0
        %512 = vmatpush1.msra.mxu0 0.0
        %513 = vmatprep.subr.mxu0 0.0
        %514 = vmatpush1.msra.mxu0 0.0
        %515 = vmatprep.subr.mxu0 0.0
        %516 = vmatpush1.msra.mxu0 0.0
        %517 = vmatprep.subr.mxu0 0.0
        %518 = vmatpush1.msra.mxu0 0.0
        %519 = vmatprep.mubr.f32.mxu0 0.0
        %520 = vmatmul.mubr.f32.gmra.mrb[0].mxu0 %v375
        %v521 = vpop.f32.mrb[0].mxu0
        %v522 = vadd.f32 0.0, %v521
        %v523 = vpop.f32.mrb[0].mxu0
        %524 = vmatprep.mubr.f32.mxu0 0.0
        %525 = vmatmul.mubr.f32.gmra.mrb[0].mxu0 %v376
        %v526 = vpop.f32.mrb[0].mxu0
        %v527 = vadd.f32 0.0, %v526
        %v528 = vpop.f32.mrb[0].mxu0
        %529 = vmatprep.mubr.f32.mxu0 0.0
        %530 = vmatmul.mubr.f32.gmra.mrb[0].mxu0 %v377
        %v531 = vpop.f32.mrb[0].mxu0
        %v532 = vadd.f32 0.0, %v531
        %v533 = vpop.f32.mrb[0].mxu0
        %534 = vmatprep.mubr.f32.mxu0 0.0
        %535 = vmatmul.mubr.f32.gmra.mrb[0].mxu0 %v378
        %v536 = vpop.f32.mrb[0].mxu0
        %v537 = vadd.f32 0.0, %v536
        %v538 = vpop.f32.mrb[0].mxu0
        %539 = vmatprep.mubr.f32.mxu0 0.0
        %540 = vmatmul.mubr.f32.gmra.mrb[0].mxu0 %v379
        %v541 = vpop.f32.mrb[0].mxu0
        %v542 = vadd.f32 0.0, %v541
        %v543 = vpop.f32.mrb[0].mxu0
        %544 = vmatprep.mubr.f32.mxu0 0.0
        %545 = vmatmul.mubr.f32.gmra.mrb[0].mxu0 %v380
        %v546 = vpop.f32.mrb[0].mxu0
        %v547 = vadd.f32 0.0, %v546
        %v548 = vpop.f32.mrb[0].mxu0
        %549 = vmatprep.mubr.f32.mxu0 0.0
        %550 = vmatmul.mubr.f32.gmra.mrb[0].mxu0 %v381
        %v551 = vpop.f32.mrb[0].mxu0
        %v552 = vadd.f32 0.0, %v551
        %v553 = vpop.f32.mrb[0].mxu0
        %554 = vmatprep.mubr.f32.mxu0 0.0
        %555 = vmatmul.mubr.f32.gmra.mrb[0].mxu0 %v382
        %v556 = vpop.f32.mrb[0].mxu0
        %v557 = vadd.f32 0.0, %v556
        %v558 = vpop.f32.mrb[0].mxu0
        %559 = vmatprep.mubr.f32.mxu0 0.0
        %560 = vmatmul.mubr.f32.gmra.mrb[0].mxu0 %v383
        %v561 = vpop.f32.mrb[0].mxu0
        %v562 = vadd.f32 0.0, %v561
        %v563 = vpop.f32.mrb[0].mxu0
        %564 = vmatprep.mubr.f32.mxu0 0.0
        %565 = vmatmul.mubr.f32.gmra.mrb[0].mxu0 %v384
        %v566 = vpop.f32.mrb[0].mxu0
        %v567 = vadd.f32 0.0, %v566
        %v568 = vpop.f32.mrb[0].mxu0
        %569 = vmatprep.mubr.f32.mxu0 0.0
        %570 = vmatmul.mubr.f32.gmra.mrb[0].mxu0 %v385
        %v571 = vpop.f32.mrb[0].mxu0
        %v572 = vadd.f32 0.0, %v571
        %v573 = vpop.f32.mrb[0].mxu0
        %574 = vmatprep.mubr.f32.mxu0 0.0
        %575 = vmatmul.mubr.f32.gmra.mrb[0].mxu0 %v386
        %v576 = vpop.f32.mrb[0].mxu0
        %v577 = vadd.f32 0.0, %v576
        %v578 = vpop.f32.mrb[0].mxu0
        %579 = vmatprep.mubr.f32.mxu0 0.0
        %580 = vmatmul.mubr.f32.gmra.mrb[0].mxu0 %v387
        %v581 = vpop.f32.mrb[0].mxu0
        %v582 = vadd.f32 0.0, %v581
        %v583 = vpop.f32.mrb[0].mxu0
        %584 = vmatprep.mubr.f32.mxu0 0.0
        %585 = vmatmul.mubr.f32.gmra.mrb[0].mxu0 %v388
        %v586 = vpop.f32.mrb[0].mxu0
        %v587 = vadd.f32 0.0, %v586
        %v588 = vpop.f32.mrb[0].mxu0
        %589 = vmatprep.mubr.f32.mxu0 0.0
        %590 = vmatmul.mubr.f32.gmra.mrb[0].mxu0 %v389
        %v591 = vpop.f32.mrb[0].mxu0
        %v592 = vadd.f32 0.0, %v591
        %v593 = vpop.f32.mrb[0].mxu0
        %594 = vmatprep.mubr.f32.mxu0 0.0
        %595 = vmatmul.mubr.f32.gmra.mrb[0].mxu0 %v390
        %v596 = vpop.f32.mrb[0].mxu0
        %v597 = vadd.f32 0.0, %v596
        %v598 = vpop.f32.mrb[0].mxu0
        %599 = vmatprep.mubr.f32.mxu0 0.0
        %600 = vmatmul.mubr.f32.gmra.mrb[0].mxu0 %v391
        %v601 = vpop.f32.mrb[0].mxu0
        %v602 = vadd.f32 0.0, %v601
        %v603 = vpop.f32.mrb[0].mxu0
        %604 = vmatprep.mubr.f32.mxu0 0.0
        %605 = vmatmul.mubr.f32.gmra.mrb[0].mxu0 %v392
        %v606 = vpop.f32.mrb[0].mxu0
        %v607 = vadd.f32 0.0, %v606
        %v608 = vpop.f32.mrb[0].mxu0
        %609 = vmatprep.mubr.f32.mxu0 0.0
        %610 = vmatmul.mubr.f32.gmra.mrb[0].mxu0 %v393
        %v611 = vpop.f32.mrb[0].mxu0
        %v612 = vadd.f32 0.0, %v611
        %v613 = vpop.f32.mrb[0].mxu0
        %614 = vmatprep.mubr.f32.mxu0 0.0
        %615 = vmatmul.mubr.f32.gmra.mrb[0].mxu0 %v394
        %v616 = vpop.f32.mrb[0].mxu0
        %v617 = vadd.f32 0.0, %v616
        %v618 = vpop.f32.mrb[0].mxu0
        %619 = vmatprep.mubr.f32.mxu0 0.0
        %620 = vmatmul.mubr.f32.gmra.mrb[0].mxu0 %v395
        %v621 = vpop.f32.mrb[0].mxu0
        %v622 = vadd.f32 0.0, %v621
        %v623 = vpop.f32.mrb[0].mxu0
        %624 = vmatprep.mubr.f32.mxu0 0.0
        %625 = vmatmul.mubr.f32.gmra.mrb[0].mxu0 %v396
        %v626 = vpop.f32.mrb[0].mxu0
        %v627 = vadd.f32 0.0, %v626
        %v628 = vpop.f32.mrb[0].mxu0
        %629 = vmatprep.mubr.f32.mxu0 0.0
        %630 = vmatmul.mubr.f32.gmra.mrb[0].mxu0 %v397
        %v631 = vpop.f32.mrb[0].mxu0
        %v632 = vadd.f32 0.0, %v631
        %v633 = vpop.f32.mrb[0].mxu0
        %634 = vmatprep.mubr.f32.mxu0 0.0
        %635 = vmatmul.mubr.f32.gmra.mrb[0].mxu0 %v398
        %v636 = vpop.f32.mrb[0].mxu0
        %v637 = vadd.f32 0.0, %v636
        %v638 = vpop.f32.mrb[0].mxu0
        %639 = vmatprep.mubr.f32.mxu0 0.0
        %640 = vmatmul.mubr.f32.gmra.mrb[0].mxu0 %v399
        %v641 = vpop.f32.mrb[0].mxu0
        %v642 = vadd.f32 0.0, %v641
        %v643 = vpop.f32.mrb[0].mxu0
        %644 = vmatprep.mubr.f32.mxu0 0.0
        %645 = vmatmul.mubr.f32.gmra.mrb[0].mxu0 %v400
        %v646 = vpop.f32.mrb[0].mxu0
        %v647 = vadd.f32 0.0, %v646
        %v648 = vpop.f32.mrb[0].mxu0
        %649 = vmatprep.mubr.f32.mxu0 0.0
        %650 = vmatmul.mubr.f32.gmra.mrb[0].mxu0 %v401
        %v651 = vpop.f32.mrb[0].mxu0
        %v652 = vadd.f32 0.0, %v651
        %v653 = vpop.f32.mrb[0].mxu0
        %654 = vmatprep.mubr.f32.mxu0 0.0
        %655 = vmatmul.mubr.f32.gmra.mrb[0].mxu0 %v402
        %v656 = vpop.f32.mrb[0].mxu0
        %v657 = vadd.f32 0.0, %v656
        %v658 = vpop.f32.mrb[0].mxu0
        %659 = vmatprep.mubr.f32.mxu0 0.0
        %660 = vmatmul.mubr.f32.gmra.mrb[0].mxu0 %v403
        %v661 = vpop.f32.mrb[0].mxu0
        %v662 = vadd.f32 0.0, %v661
        %v663 = vpop.f32.mrb[0].mxu0
        %664 = vmatprep.mubr.f32.mxu0 0.0
        %665 = vmatmul.mubr.f32.gmra.mrb[0].mxu0 %v404
        %v666 = vpop.f32.mrb[0].mxu0
        %v667 = vadd.f32 0.0, %v666
        %v668 = vpop.f32.mrb[0].mxu0
        %669 = vmatprep.mubr.f32.mxu0 0.0
        %670 = vmatmul.mubr.f32.gmra.mrb[0].mxu0 %v405
        %v671 = vpop.f32.mrb[0].mxu0
        %v672 = vadd.f32 0.0, %v671
        %v673 = vpop.f32.mrb[0].mxu0
        %674 = vmatprep.mubr.f32.mxu0 0.0
        %675 = vmatmul.mubr.f32.gmra.mrb[0].mxu0 %v406
        %v676 = vpop.f32.mrb[0].mxu0
        %v677 = vadd.f32 0.0, %v676
        %v678 = vpop.f32.mrb[0].mxu0
        %679 = vdwg.mxu0
        %v680 = vadd.f32 %v423, %v522
        %v681 = vadd.f32 %v424, %v527
        %v682 = vadd.f32 %v425, %v532
        %v683 = vadd.f32 %v426, %v537
        %v684 = vadd.f32 %v427, %v542
        %v685 = vadd.f32 %v428, %v547
        %v686 = vadd.f32 %v429, %v552
        %v687 = vadd.f32 %v430, %v557
        %v688 = vadd.f32 %v431, %v562
        %v689 = vadd.f32 %v432, %v567
        %v690 = vadd.f32 %v433, %v572
        %v691 = vadd.f32 %v434, %v577
        %v692 = vadd.f32 %v435, %v582
        %v693 = vadd.f32 %v436, %v587
        %v694 = vadd.f32 %v437, %v592
        %v695 = vadd.f32 %v438, %v597
        %v696 = vadd.f32 %v439, %v602
        %v697 = vadd.f32 %v440, %v607
        %v698 = vadd.f32 %v441, %v612
        %v699 = vadd.f32 %v442, %v617
        %v700 = vadd.f32 %v443, %v622
        %v701 = vadd.f32 %v444, %v627
        %v702 = vadd.f32 %v445, %v632
        %v703 = vadd.f32 %v446, %v637
        %v704 = vadd.f32 %v447, %v642
        %v705 = vadd.f32 %v448, %v647
        %v706 = vadd.f32 %v449, %v652
        %v707 = vadd.f32 %v450, %v657
        %v708 = vadd.f32 %v451, %v662
        %v709 = vadd.f32 %v452, %v667
        %v710 = vadd.f32 %v453, %v672
        %v711 = vadd.f32 %v454, %v677
        %vm712 = vcmask 523264
        %713 = vst.msk [vmem:[#allocation2] sm:$0xff] %vm712, %v680
        %714 = vst.msk [vmem:[#allocation2 + $0x8] sm:$0xff] %vm712, %v681
        %715 = vst.msk [vmem:[#allocation2 + $0x10] sm:$0xff] %vm712, %v682
        %716 = vst.msk [vmem:[#allocation2 + $0x18] sm:$0xff] %vm712, %v683
        %717 = vst.msk [vmem:[#allocation2 + $0x20] sm:$0xff] %vm712, %v684
        %718 = vst.msk [vmem:[#allocation2 + $0x28] sm:$0xff] %vm712, %v685
        %719 = vst.msk [vmem:[#allocation2 + $0x30] sm:$0xff] %vm712, %v686
        %720 = vst.msk [vmem:[#allocation2 + $0x38] sm:$0xff] %vm712, %v687
        %721 = vst.msk [vmem:[#allocation2 + $0x40] sm:$0xff] %vm712, %v688
        %722 = vst.msk [vmem:[#allocation2 + $0x48] sm:$0xff] %vm712, %v689
        %723 = vst.msk [vmem:[#allocation2 + $0x50] sm:$0xff] %vm712, %v690
        %724 = vst.msk [vmem:[#allocation2 + $0x58] sm:$0xff] %vm712, %v691
        %725 = vst.msk [vmem:[#allocation2 + $0x60] sm:$0xff] %vm712, %v692
        %726 = vst.msk [vmem:[#allocation2 + $0x68] sm:$0xff] %vm712, %v693
        %727 = vst.msk [vmem:[#allocation2 + $0x70] sm:$0xff] %vm712, %v694
        %728 = vst.msk [vmem:[#allocation2 + $0x78] sm:$0xff] %vm712, %v695
        %729 = vst.msk [vmem:[#allocation2 + $0x80] sm:$0xff] %vm712, %v696
        %730 = vst.msk [vmem:[#allocation2 + $0x88] sm:$0xff] %vm712, %v697
        %731 = vst.msk [vmem:[#allocation2 + $0x90] sm:$0xff] %vm712, %v698
        %732 = vst.msk [vmem:[#allocation2 + $0x98] sm:$0xff] %vm712, %v699
        %733 = vst.msk [vmem:[#allocation2 + $0xa0] sm:$0xff] %vm712, %v700
        %734 = vst.msk [vmem:[#allocation2 + $0xa8] sm:$0xff] %vm712, %v701
        %735 = vst.msk [vmem:[#allocation2 + $0xb0] sm:$0xff] %vm712, %v702
        %736 = vst.msk [vmem:[#allocation2 + $0xb8] sm:$0xff] %vm712, %v703
        %737 = vst.msk [vmem:[#allocation2 + $0xc0] sm:$0xff] %vm712, %v704
        %738 = vst.msk [vmem:[#allocation2 + $0xc8] sm:$0xff] %vm712, %v705
        %739 = vst.msk [vmem:[#allocation2 + $0xd0] sm:$0xff] %vm712, %v706
        %740 = vst.msk [vmem:[#allocation2 + $0xd8] sm:$0xff] %vm712, %v707
        %741 = vst.msk [vmem:[#allocation2 + $0xe0] sm:$0xff] %vm712, %v708
        %742 = vst.msk [vmem:[#allocation2 + $0xe8] sm:$0xff] %vm712, %v709
        %743 = vst.msk [vmem:[#allocation2 + $0xf0] sm:$0xff] %vm712, %v710
        %744 = vst.msk [vmem:[#allocation2 + $0xf8] sm:$0xff] %vm712, %v711
        // Predicated region
        $region57: #{tpu_custom_call.1} parent=47 // pred_check
          %p745 = pneg %p338
        $region58: #{tpu_custom_call.1} parent=47 // pred_check_branch
          %747 = sbr.rel (%p745) target = $region60
        $region59: #{tpu_custom_call.1} parent=47 // pred_region
          %v748 = vld [vmem:[#allocation2] sm:$0xff]
          %v749 = vld [vmem:[#allocation2 + $0x8] sm:$0xff]
          %v750 = vld [vmem:[#allocation2 + $0x10] sm:$0xff]
          %v751 = vld [vmem:[#allocation2 + $0x18] sm:$0xff]
          %v752 = vld [vmem:[#allocation2 + $0x20] sm:$0xff]
          %v753 = vld [vmem:[#allocation2 + $0x28] sm:$0xff]
          %v754 = vld [vmem:[#allocation2 + $0x30] sm:$0xff]
          %v755 = vld [vmem:[#allocation2 + $0x38] sm:$0xff]
          %v756 = vld [vmem:[#allocation2 + $0x40] sm:$0xff]
          %v757 = vld [vmem:[#allocation2 + $0x48] sm:$0xff]
          %v758 = vld [vmem:[#allocation2 + $0x50] sm:$0xff]
          %v759 = vld [vmem:[#allocation2 + $0x58] sm:$0xff]
          %v760 = vld [vmem:[#allocation2 + $0x60] sm:$0xff]
          %v761 = vld [vmem:[#allocation2 + $0x68] sm:$0xff]
          %v762 = vld [vmem:[#allocation2 + $0x70] sm:$0xff]
          %v763 = vld [vmem:[#allocation2 + $0x78] sm:$0xff]
          %v764 = vld [vmem:[#allocation2 + $0x80] sm:$0xff]
          %v765 = vld [vmem:[#allocation2 + $0x88] sm:$0xff]
          %v766 = vld [vmem:[#allocation2 + $0x90] sm:$0xff]
          %v767 = vld [vmem:[#allocation2 + $0x98] sm:$0xff]
          %v768 = vld [vmem:[#allocation2 + $0xa0] sm:$0xff]
          %v769 = vld [vmem:[#allocation2 + $0xa8] sm:$0xff]
          %v770 = vld [vmem:[#allocation2 + $0xb0] sm:$0xff]
          %v771 = vld [vmem:[#allocation2 + $0xb8] sm:$0xff]
          %v772 = vld [vmem:[#allocation2 + $0xc0] sm:$0xff]
          %v773 = vld [vmem:[#allocation2 + $0xc8] sm:$0xff]
          %v774 = vld [vmem:[#allocation2 + $0xd0] sm:$0xff]
          %v775 = vld [vmem:[#allocation2 + $0xd8] sm:$0xff]
          %v776 = vld [vmem:[#allocation2 + $0xe0] sm:$0xff]
          %v777 = vld [vmem:[#allocation2 + $0xe8] sm:$0xff]
          %v778 = vld [vmem:[#allocation2 + $0xf0] sm:$0xff]
          %v779 = vld [vmem:[#allocation2 + $0xf8] sm:$0xff]
          %v780 = vld [vmem:[%s2] sm:$0x1]
          %v782 = vlaneseq
          %v783 = vshrl.u32 %v782, 7
          %v784 = vsub.s32 0, %v783
          %v785 = vrot.slane %v780, %v784
          %v787 = vadd.f32 %v748, %v785
          %v788 = vadd.f32 %v749, %v785
          %v789 = vadd.f32 %v750, %v785
          %v790 = vadd.f32 %v751, %v785
          %v791 = vadd.f32 %v752, %v785
          %v792 = vadd.f32 %v753, %v785
          %v793 = vadd.f32 %v754, %v785
          %v794 = vadd.f32 %v755, %v785
          %v795 = vadd.f32 %v756, %v785
          %v796 = vadd.f32 %v757, %v785
          %v797 = vadd.f32 %v758, %v785
          %v798 = vadd.f32 %v759, %v785
          %v799 = vadd.f32 %v760, %v785
          %v800 = vadd.f32 %v761, %v785
          %v801 = vadd.f32 %v762, %v785
          %v802 = vadd.f32 %v763, %v785
          %v803 = vadd.f32 %v764, %v785
          %v804 = vadd.f32 %v765, %v785
          %v805 = vadd.f32 %v766, %v785
          %v806 = vadd.f32 %v767, %v785
          %v807 = vadd.f32 %v768, %v785
          %v808 = vadd.f32 %v769, %v785
          %v809 = vadd.f32 %v770, %v785
          %v810 = vadd.f32 %v771, %v785
          %v811 = vadd.f32 %v772, %v785
          %v812 = vadd.f32 %v773, %v785
          %v813 = vadd.f32 %v774, %v785
          %v814 = vadd.f32 %v775, %v785
          %v815 = vadd.f32 %v776, %v785
          %v816 = vadd.f32 %v777, %v785
          %v817 = vadd.f32 %v778, %v785
          %v818 = vadd.f32 %v779, %v785
          %v819 = vmax.f32 %v787, 0.0
          %v820 = vmax.f32 %v788, 0.0
          %v821 = vmax.f32 %v789, 0.0
          %v822 = vmax.f32 %v790, 0.0
          %v823 = vmax.f32 %v791, 0.0
          %v824 = vmax.f32 %v792, 0.0
          %v825 = vmax.f32 %v793, 0.0
          %v826 = vmax.f32 %v794, 0.0
          %v827 = vmax.f32 %v795, 0.0
          %v828 = vmax.f32 %v796, 0.0
          %v829 = vmax.f32 %v797, 0.0
          %v830 = vmax.f32 %v798, 0.0
          %v831 = vmax.f32 %v799, 0.0
          %v832 = vmax.f32 %v800, 0.0
          %v833 = vmax.f32 %v801, 0.0
          %v834 = vmax.f32 %v802, 0.0
          %v835 = vmax.f32 %v803, 0.0
          %v836 = vmax.f32 %v804, 0.0
          %v837 = vmax.f32 %v805, 0.0
          %v838 = vmax.f32 %v806, 0.0
          %v839 = vmax.f32 %v807, 0.0
          %v840 = vmax.f32 %v808, 0.0
          %v841 = vmax.f32 %v809, 0.0
          %v842 = vmax.f32 %v810, 0.0
          %v843 = vmax.f32 %v811, 0.0
          %v844 = vmax.f32 %v812, 0.0
          %v845 = vmax.f32 %v813, 0.0
          %v846 = vmax.f32 %v814, 0.0
          %v847 = vmax.f32 %v815, 0.0
          %v848 = vmax.f32 %v816, 0.0
          %v849 = vmax.f32 %v817, 0.0
          %v850 = vmax.f32 %v818, 0.0
          %v851 = vld [vmem:[%s3] sm:$0xff]
          %v852 = vld [vmem:[%s3 + $0x8] sm:$0xff]
          %v853 = vld [vmem:[%s3 + $0x10] sm:$0xff]
          %v854 = vld [vmem:[%s3 + $0x18] sm:$0xff]
          %v855 = vld [vmem:[%s3 + $0x20] sm:$0xff]
          %v856 = vld [vmem:[%s3 + $0x28] sm:$0xff]
          %v857 = vld [vmem:[%s3 + $0x30] sm:$0xff]
          %v858 = vld [vmem:[%s3 + $0x38] sm:$0xff]
          %v859 = vld [vmem:[%s4] sm:$0x1]
          %v861 = vlaneseq
          %v862 = vshrl.u32 %v861, 7
          %v863 = vsub.s32 0, %v862
          %v864 = vrot.slane %v859, %v863
          %v867 = vsel %vm712, %v819, 0
          %v870 = vsel %vm712, %v820, 0
          %v873 = vsel %vm712, %v821, 0
          %v876 = vsel %vm712, %v822, 0
          %v879 = vsel %vm712, %v823, 0
          %v882 = vsel %vm712, %v824, 0
          %v885 = vsel %vm712, %v825, 0
          %v888 = vsel %vm712, %v826, 0
          %v891 = vsel %vm712, %v827, 0
          %v894 = vsel %vm712, %v828, 0
          %v897 = vsel %vm712, %v829, 0
          %v900 = vsel %vm712, %v830, 0
          %v903 = vsel %vm712, %v831, 0
          %v906 = vsel %vm712, %v832, 0
          %v909 = vsel %vm712, %v833, 0
          %v912 = vsel %vm712, %v834, 0
          %v915 = vsel %vm712, %v835, 0
          %v918 = vsel %vm712, %v836, 0
          %v921 = vsel %vm712, %v837, 0
          %v924 = vsel %vm712, %v838, 0
          %v927 = vsel %vm712, %v839, 0
          %v930 = vsel %vm712, %v840, 0
          %v933 = vsel %vm712, %v841, 0
          %v936 = vsel %vm712, %v842, 0
          %v939 = vsel %vm712, %v843, 0
          %v942 = vsel %vm712, %v844, 0
          %v945 = vsel %vm712, %v845, 0
          %v948 = vsel %vm712, %v846, 0
          %v951 = vsel %vm712, %v847, 0
          %v954 = vsel %vm712, %v848, 0
          %v957 = vsel %vm712, %v849, 0
          %v960 = vsel %vm712, %v850, 0
          %962 = vmatprep.subr.mxu0 0.0
          %963 = vmatpush1.msra.mxu0 %v851
          %964 = vmatprep.subr.mxu0 0.0
          %965 = vmatpush1.msra.mxu0 %v852
          %966 = vmatprep.subr.mxu0 0.0
          %967 = vmatpush1.msra.mxu0 %v853
          %968 = vmatprep.subr.mxu0 0.0
          %969 = vmatpush1.msra.mxu0 %v854
          %970 = vmatprep.subr.mxu0 0.0
          %971 = vmatpush1.msra.mxu0 %v855
          %972 = vmatprep.subr.mxu0 0.0
          %973 = vmatpush1.msra.mxu0 %v856
          %974 = vmatprep.subr.mxu0 0.0
          %975 = vmatpush1.msra.mxu0 %v857
          %976 = vmatprep.subr.mxu0 0.0
          %977 = vmatpush1.msra.mxu0 %v858
          %978 = vmatprep.subr.mxu0 0.0
          %979 = vmatpush1.msra.mxu0 0.0
          %980 = vmatprep.subr.mxu0 0.0
          %981 = vmatpush1.msra.mxu0 0.0
          %982 = vmatprep.subr.mxu0 0.0
          %983 = vmatpush1.msra.mxu0 0.0
          %984 = vmatprep.subr.mxu0 0.0
          %985 = vmatpush1.msra.mxu0 0.0
          %986 = vmatprep.subr.mxu0 0.0
          %987 = vmatpush1.msra.mxu0 0.0
          %988 = vmatprep.subr.mxu0 0.0
          %989 = vmatpush1.msra.mxu0 0.0
          %990 = vmatprep.subr.mxu0 0.0
          %991 = vmatpush1.msra.mxu0 0.0
          %992 = vmatprep.subr.mxu0 0.0
          %993 = vmatpush1.msra.mxu0 0.0
          %994 = vmatprep.subr.mxu0 0.0
          %995 = vmatpush1.msra.mxu0 0.0
          %996 = vmatprep.subr.mxu0 0.0
          %997 = vmatpush1.msra.mxu0 0.0
          %998 = vmatprep.subr.mxu0 0.0
          %999 = vmatpush1.msra.mxu0 0.0
          %1000 = vmatprep.subr.mxu0 0.0
          %1001 = vmatpush1.msra.mxu0 0.0
          %1002 = vmatprep.subr.mxu0 0.0
          %1003 = vmatpush1.msra.mxu0 0.0
          %1004 = vmatprep.subr.mxu0 0.0
          %1005 = vmatpush1.msra.mxu0 0.0
          %1006 = vmatprep.subr.mxu0 0.0
          %1007 = vmatpush1.msra.mxu0 0.0
          %1008 = vmatprep.subr.mxu0 0.0
          %1009 = vmatpush1.msra.mxu0 0.0
          %1010 = vmatprep.subr.mxu0 0.0
          %1011 = vmatpush1.msra.mxu0 0.0
          %1012 = vmatprep.subr.mxu0 0.0
          %1013 = vmatpush1.msra.mxu0 0.0
          %1014 = vmatprep.subr.mxu0 0.0
          %1015 = vmatpush1.msra.mxu0 0.0
          %1016 = vmatprep.subr.mxu0 0.0
          %1017 = vmatpush1.msra.mxu0 0.0
          %1018 = vmatprep.subr.mxu0 0.0
          %1019 = vmatpush1.msra.mxu0 0.0
          %1020 = vmatprep.subr.mxu0 0.0
          %1021 = vmatpush1.msra.mxu0 0.0
          %1022 = vmatprep.subr.mxu0 0.0
          %1023 = vmatpush1.msra.mxu0 0.0
          %1024 = vmatprep.subr.mxu0 0.0
          %1025 = vmatpush1.msra.mxu0 0.0
          %1026 = vmatprep.mubr.f32.mxu0 0.0
          %1027 = vmatmul.mubr.f32.gmra.mrb[0].mxu0 %v867
          %v1028 = vpop.f32.mrb[0].mxu0
          %v1029 = vadd.f32 %v864, %v1028
          %v1030 = vpop.f32.mrb[0].mxu0
          %1031 = vmatprep.mubr.f32.mxu0 0.0
          %1032 = vmatmul.mubr.f32.gmra.mrb[0].mxu0 %v870
          %v1033 = vpop.f32.mrb[0].mxu0
          %v1034 = vadd.f32 %v864, %v1033
          %v1035 = vpop.f32.mrb[0].mxu0
          %1036 = vmatprep.mubr.f32.mxu0 0.0
          %1037 = vmatmul.mubr.f32.gmra.mrb[0].mxu0 %v873
          %v1038 = vpop.f32.mrb[0].mxu0
          %v1039 = vadd.f32 %v864, %v1038
          %v1040 = vpop.f32.mrb[0].mxu0
          %1041 = vmatprep.mubr.f32.mxu0 0.0
          %1042 = vmatmul.mubr.f32.gmra.mrb[0].mxu0 %v876
          %v1043 = vpop.f32.mrb[0].mxu0
          %v1044 = vadd.f32 %v864, %v1043
          %v1045 = vpop.f32.mrb[0].mxu0
          %1046 = vmatprep.mubr.f32.mxu0 0.0
          %1047 = vmatmul.mubr.f32.gmra.mrb[0].mxu0 %v879
          %v1048 = vpop.f32.mrb[0].mxu0
          %v1049 = vadd.f32 %v864, %v1048
          %v1050 = vpop.f32.mrb[0].mxu0
          %1051 = vmatprep.mubr.f32.mxu0 0.0
          %1052 = vmatmul.mubr.f32.gmra.mrb[0].mxu0 %v882
          %v1053 = vpop.f32.mrb[0].mxu0
          %v1054 = vadd.f32 %v864, %v1053
          %v1055 = vpop.f32.mrb[0].mxu0
          %1056 = vmatprep.mubr.f32.mxu0 0.0
          %1057 = vmatmul.mubr.f32.gmra.mrb[0].mxu0 %v885
          %v1058 = vpop.f32.mrb[0].mxu0
          %v1059 = vadd.f32 %v864, %v1058
          %v1060 = vpop.f32.mrb[0].mxu0
          %1061 = vmatprep.mubr.f32.mxu0 0.0
          %1062 = vmatmul.mubr.f32.gmra.mrb[0].mxu0 %v888
          %v1063 = vpop.f32.mrb[0].mxu0
          %v1064 = vadd.f32 %v864, %v1063
          %v1065 = vpop.f32.mrb[0].mxu0
          %1066 = vmatprep.mubr.f32.mxu0 0.0
          %1067 = vmatmul.mubr.f32.gmra.mrb[0].mxu0 %v891
          %v1068 = vpop.f32.mrb[0].mxu0
          %v1069 = vadd.f32 %v864, %v1068
          %v1070 = vpop.f32.mrb[0].mxu0
          %1071 = vmatprep.mubr.f32.mxu0 0.0
          %1072 = vmatmul.mubr.f32.gmra.mrb[0].mxu0 %v894
          %v1073 = vpop.f32.mrb[0].mxu0
          %v1074 = vadd.f32 %v864, %v1073
          %v1075 = vpop.f32.mrb[0].mxu0
          %1076 = vmatprep.mubr.f32.mxu0 0.0
          %1077 = vmatmul.mubr.f32.gmra.mrb[0].mxu0 %v897
          %v1078 = vpop.f32.mrb[0].mxu0
          %v1079 = vadd.f32 %v864, %v1078
          %v1080 = vpop.f32.mrb[0].mxu0
          %1081 = vmatprep.mubr.f32.mxu0 0.0
          %1082 = vmatmul.mubr.f32.gmra.mrb[0].mxu0 %v900
          %v1083 = vpop.f32.mrb[0].mxu0
          %v1084 = vadd.f32 %v864, %v1083
          %v1085 = vpop.f32.mrb[0].mxu0
          %1086 = vmatprep.mubr.f32.mxu0 0.0
          %1087 = vmatmul.mubr.f32.gmra.mrb[0].mxu0 %v903
          %v1088 = vpop.f32.mrb[0].mxu0
          %v1089 = vadd.f32 %v864, %v1088
          %v1090 = vpop.f32.mrb[0].mxu0
          %1091 = vmatprep.mubr.f32.mxu0 0.0
          %1092 = vmatmul.mubr.f32.gmra.mrb[0].mxu0 %v906
          %v1093 = vpop.f32.mrb[0].mxu0
          %v1094 = vadd.f32 %v864, %v1093
          %v1095 = vpop.f32.mrb[0].mxu0
          %1096 = vmatprep.mubr.f32.mxu0 0.0
          %1097 = vmatmul.mubr.f32.gmra.mrb[0].mxu0 %v909
          %v1098 = vpop.f32.mrb[0].mxu0
          %v1099 = vadd.f32 %v864, %v1098
          %v1100 = vpop.f32.mrb[0].mxu0
          %1101 = vmatprep.mubr.f32.mxu0 0.0
          %1102 = vmatmul.mubr.f32.gmra.mrb[0].mxu0 %v912
          %v1103 = vpop.f32.mrb[0].mxu0
          %v1104 = vadd.f32 %v864, %v1103
          %v1105 = vpop.f32.mrb[0].mxu0
          %1106 = vmatprep.mubr.f32.mxu0 0.0
          %1107 = vmatmul.mubr.f32.gmra.mrb[0].mxu0 %v915
          %v1108 = vpop.f32.mrb[0].mxu0
          %v1109 = vadd.f32 %v864, %v1108
          %v1110 = vpop.f32.mrb[0].mxu0
          %1111 = vmatprep.mubr.f32.mxu0 0.0
          %1112 = vmatmul.mubr.f32.gmra.mrb[0].mxu0 %v918
          %v1113 = vpop.f32.mrb[0].mxu0
          %v1114 = vadd.f32 %v864, %v1113
          %v1115 = vpop.f32.mrb[0].mxu0
          %1116 = vmatprep.mubr.f32.mxu0 0.0
          %1117 = vmatmul.mubr.f32.gmra.mrb[0].mxu0 %v921
          %v1118 = vpop.f32.mrb[0].mxu0
          %v1119 = vadd.f32 %v864, %v1118
          %v1120 = vpop.f32.mrb[0].mxu0
          %1121 = vmatprep.mubr.f32.mxu0 0.0
          %1122 = vmatmul.mubr.f32.gmra.mrb[0].mxu0 %v924
          %v1123 = vpop.f32.mrb[0].mxu0
          %v1124 = vadd.f32 %v864, %v1123
          %v1125 = vpop.f32.mrb[0].mxu0
          %1126 = vmatprep.mubr.f32.mxu0 0.0
          %1127 = vmatmul.mubr.f32.gmra.mrb[0].mxu0 %v927
          %v1128 = vpop.f32.mrb[0].mxu0
          %v1129 = vadd.f32 %v864, %v1128
          %v1130 = vpop.f32.mrb[0].mxu0
          %1131 = vmatprep.mubr.f32.mxu0 0.0
          %1132 = vmatmul.mubr.f32.gmra.mrb[0].mxu0 %v930
          %v1133 = vpop.f32.mrb[0].mxu0
          %v1134 = vadd.f32 %v864, %v1133
          %v1135 = vpop.f32.mrb[0].mxu0
          %1136 = vmatprep.mubr.f32.mxu0 0.0
          %1137 = vmatmul.mubr.f32.gmra.mrb[0].mxu0 %v933
          %v1138 = vpop.f32.mrb[0].mxu0
          %v1139 = vadd.f32 %v864, %v1138
          %v1140 = vpop.f32.mrb[0].mxu0
          %1141 = vmatprep.mubr.f32.mxu0 0.0
          %1142 = vmatmul.mubr.f32.gmra.mrb[0].mxu0 %v936
          %v1143 = vpop.f32.mrb[0].mxu0
          %v1144 = vadd.f32 %v864, %v1143
          %v1145 = vpop.f32.mrb[0].mxu0
          %1146 = vmatprep.mubr.f32.mxu0 0.0
          %1147 = vmatmul.mubr.f32.gmra.mrb[0].mxu0 %v939
          %v1148 = vpop.f32.mrb[0].mxu0
          %v1149 = vadd.f32 %v864, %v1148
          %v1150 = vpop.f32.mrb[0].mxu0
          %1151 = vmatprep.mubr.f32.mxu0 0.0
          %1152 = vmatmul.mubr.f32.gmra.mrb[0].mxu0 %v942
          %v1153 = vpop.f32.mrb[0].mxu0
          %v1154 = vadd.f32 %v864, %v1153
          %v1155 = vpop.f32.mrb[0].mxu0
          %1156 = vmatprep.mubr.f32.mxu0 0.0
          %1157 = vmatmul.mubr.f32.gmra.mrb[0].mxu0 %v945
          %v1158 = vpop.f32.mrb[0].mxu0
          %v1159 = vadd.f32 %v864, %v1158
          %v1160 = vpop.f32.mrb[0].mxu0
          %1161 = vmatprep.mubr.f32.mxu0 0.0
          %1162 = vmatmul.mubr.f32.gmra.mrb[0].mxu0 %v948
          %v1163 = vpop.f32.mrb[0].mxu0
          %v1164 = vadd.f32 %v864, %v1163
          %v1165 = vpop.f32.mrb[0].mxu0
          %1166 = vmatprep.mubr.f32.mxu0 0.0
          %1167 = vmatmul.mubr.f32.gmra.mrb[0].mxu0 %v951
          %v1168 = vpop.f32.mrb[0].mxu0
          %v1169 = vadd.f32 %v864, %v1168
          %v1170 = vpop.f32.mrb[0].mxu0
          %1171 = vmatprep.mubr.f32.mxu0 0.0
          %1172 = vmatmul.mubr.f32.gmra.mrb[0].mxu0 %v954
          %v1173 = vpop.f32.mrb[0].mxu0
          %v1174 = vadd.f32 %v864, %v1173
          %v1175 = vpop.f32.mrb[0].mxu0
          %1176 = vmatprep.mubr.f32.mxu0 0.0
          %1177 = vmatmul.mubr.f32.gmra.mrb[0].mxu0 %v957
          %v1178 = vpop.f32.mrb[0].mxu0
          %v1179 = vadd.f32 %v864, %v1178
          %v1180 = vpop.f32.mrb[0].mxu0
          %1181 = vmatprep.mubr.f32.mxu0 0.0
          %1182 = vmatmul.mubr.f32.gmra.mrb[0].mxu0 %v960
          %v1183 = vpop.f32.mrb[0].mxu0
          %v1184 = vadd.f32 %v864, %v1183
          %v1185 = vpop.f32.mrb[0].mxu0
          %1186 = vdwg.mxu0
          %v1187 = vmax.f32 %v1029, 0.0
          %v1188 = vmax.f32 %v1034, 0.0
          %v1189 = vmax.f32 %v1039, 0.0
          %v1190 = vmax.f32 %v1044, 0.0
          %v1191 = vmax.f32 %v1049, 0.0
          %v1192 = vmax.f32 %v1054, 0.0
          %v1193 = vmax.f32 %v1059, 0.0
          %v1194 = vmax.f32 %v1064, 0.0
          %v1195 = vmax.f32 %v1069, 0.0
          %v1196 = vmax.f32 %v1074, 0.0
          %v1197 = vmax.f32 %v1079, 0.0
          %v1198 = vmax.f32 %v1084, 0.0
          %v1199 = vmax.f32 %v1089, 0.0
          %v1200 = vmax.f32 %v1094, 0.0
          %v1201 = vmax.f32 %v1099, 0.0
          %v1202 = vmax.f32 %v1104, 0.0
          %v1203 = vmax.f32 %v1109, 0.0
          %v1204 = vmax.f32 %v1114, 0.0
          %v1205 = vmax.f32 %v1119, 0.0
          %v1206 = vmax.f32 %v1124, 0.0
          %v1207 = vmax.f32 %v1129, 0.0
          %v1208 = vmax.f32 %v1134, 0.0
          %v1209 = vmax.f32 %v1139, 0.0
          %v1210 = vmax.f32 %v1144, 0.0
          %v1211 = vmax.f32 %v1149, 0.0
          %v1212 = vmax.f32 %v1154, 0.0
          %v1213 = vmax.f32 %v1159, 0.0
          %v1214 = vmax.f32 %v1164, 0.0
          %v1215 = vmax.f32 %v1169, 0.0
          %v1216 = vmax.f32 %v1174, 0.0
          %v1217 = vmax.f32 %v1179, 0.0
          %v1218 = vmax.f32 %v1184, 0.0
          %v1219 = vld [vmem:[%s5] sm:$0xff]
          %v1220 = vld [vmem:[%s5 + $0x8] sm:$0xff]
          %v1221 = vld [vmem:[%s5 + $0x10] sm:$0xff]
          %v1222 = vld [vmem:[%s5 + $0x18] sm:$0xff]
          %v1223 = vld [vmem:[%s6] sm:$0x1]
          %v1225 = vlaneseq
          %v1226 = vshrl.u32 %v1225, 7
          %v1227 = vsub.s32 0, %v1226
          %v1228 = vrot.slane %v1223, %v1227
          %vm1230 = vcmask 261120
          %v1232 = vsel %vm1230, %v1187, 0
          %v1235 = vsel %vm1230, %v1188, 0
          %v1238 = vsel %vm1230, %v1189, 0
          %v1241 = vsel %vm1230, %v1190, 0
          %v1244 = vsel %vm1230, %v1191, 0
          %v1247 = vsel %vm1230, %v1192, 0
          %v1250 = vsel %vm1230, %v1193, 0
          %v1253 = vsel %vm1230, %v1194, 0
          %v1256 = vsel %vm1230, %v1195, 0
          %v1259 = vsel %vm1230, %v1196, 0
          %v1262 = vsel %vm1230, %v1197, 0
          %v1265 = vsel %vm1230, %v1198, 0
          %v1268 = vsel %vm1230, %v1199, 0
          %v1271 = vsel %vm1230, %v1200, 0
          %v1274 = vsel %vm1230, %v1201, 0
          %v1277 = vsel %vm1230, %v1202, 0
          %v1280 = vsel %vm1230, %v1203, 0
          %v1283 = vsel %vm1230, %v1204, 0
          %v1286 = vsel %vm1230, %v1205, 0
          %v1289 = vsel %vm1230, %v1206, 0
          %v1292 = vsel %vm1230, %v1207, 0
          %v1295 = vsel %vm1230, %v1208, 0
          %v1298 = vsel %vm1230, %v1209, 0
          %v1301 = vsel %vm1230, %v1210, 0
          %v1304 = vsel %vm1230, %v1211, 0
          %v1307 = vsel %vm1230, %v1212, 0
          %v1310 = vsel %vm1230, %v1213, 0
          %v1313 = vsel %vm1230, %v1214, 0
          %v1316 = vsel %vm1230, %v1215, 0
          %v1319 = vsel %vm1230, %v1216, 0
          %v1322 = vsel %vm1230, %v1217, 0
          %v1325 = vsel %vm1230, %v1218, 0
          %1327 = vmatprep.subr.mxu0 0.0
          %1328 = vmatpush1.msra.mxu0 %v1219
          %1329 = vmatprep.subr.mxu0 0.0
          %1330 = vmatpush1.msra.mxu0 %v1220
          %1331 = vmatprep.subr.mxu0 0.0
          %1332 = vmatpush1.msra.mxu0 %v1221
          %1333 = vmatprep.subr.mxu0 0.0
          %1334 = vmatpush1.msra.mxu0 %v1222
          %1335 = vmatprep.subr.mxu0 0.0
          %1336 = vmatpush1.msra.mxu0 0.0
          %1337 = vmatprep.subr.mxu0 0.0
          %1338 = vmatpush1.msra.mxu0 0.0
          %1339 = vmatprep.subr.mxu0 0.0
          %1340 = vmatpush1.msra.mxu0 0.0
          %1341 = vmatprep.subr.mxu0 0.0
          %1342 = vmatpush1.msra.mxu0 0.0
          %1343 = vmatprep.subr.mxu0 0.0
          %1344 = vmatpush1.msra.mxu0 0.0
          %1345 = vmatprep.subr.mxu0 0.0
          %1346 = vmatpush1.msra.mxu0 0.0
          %1347 = vmatprep.subr.mxu0 0.0
          %1348 = vmatpush1.msra.mxu0 0.0
          %1349 = vmatprep.subr.mxu0 0.0
          %1350 = vmatpush1.msra.mxu0 0.0
          %1351 = vmatprep.subr.mxu0 0.0
          %1352 = vmatpush1.msra.mxu0 0.0
          %1353 = vmatprep.subr.mxu0 0.0
          %1354 = vmatpush1.msra.mxu0 0.0
          %1355 = vmatprep.subr.mxu0 0.0
          %1356 = vmatpush1.msra.mxu0 0.0
          %1357 = vmatprep.subr.mxu0 0.0
          %1358 = vmatpush1.msra.mxu0 0.0
          %1359 = vmatprep.subr.mxu0 0.0
          %1360 = vmatpush1.msra.mxu0 0.0
          %1361 = vmatprep.subr.mxu0 0.0
          %1362 = vmatpush1.msra.mxu0 0.0
          %1363 = vmatprep.subr.mxu0 0.0
          %1364 = vmatpush1.msra.mxu0 0.0
          %1365 = vmatprep.subr.mxu0 0.0
          %1366 = vmatpush1.msra.mxu0 0.0
          %1367 = vmatprep.subr.mxu0 0.0
          %1368 = vmatpush1.msra.mxu0 0.0
          %1369 = vmatprep.subr.mxu0 0.0
          %1370 = vmatpush1.msra.mxu0 0.0
          %1371 = vmatprep.subr.mxu0 0.0
          %1372 = vmatpush1.msra.mxu0 0.0
          %1373 = vmatprep.subr.mxu0 0.0
          %1374 = vmatpush1.msra.mxu0 0.0
          %1375 = vmatprep.subr.mxu0 0.0
          %1376 = vmatpush1.msra.mxu0 0.0
          %1377 = vmatprep.subr.mxu0 0.0
          %1378 = vmatpush1.msra.mxu0 0.0
          %1379 = vmatprep.subr.mxu0 0.0
          %1380 = vmatpush1.msra.mxu0 0.0
          %1381 = vmatprep.subr.mxu0 0.0
          %1382 = vmatpush1.msra.mxu0 0.0
          %1383 = vmatprep.subr.mxu0 0.0
          %1384 = vmatpush1.msra.mxu0 0.0
          %1385 = vmatprep.subr.mxu0 0.0
          %1386 = vmatpush1.msra.mxu0 0.0
          %1387 = vmatprep.subr.mxu0 0.0
          %1388 = vmatpush1.msra.mxu0 0.0
          %1389 = vmatprep.subr.mxu0 0.0
          %1390 = vmatpush1.msra.mxu0 0.0
          %1391 = vmatprep.mubr.f32.mxu0 0.0
          %1392 = vmatmul.mubr.f32.gmra.mrb[0].mxu0 %v1232
          %v1393 = vpop.f32.mrb[0].mxu0
          %v1394 = vadd.f32 %v1228, %v1393
          %v1395 = vpop.f32.mrb[0].mxu0
          %1396 = vmatprep.mubr.f32.mxu0 0.0
          %1397 = vmatmul.mubr.f32.gmra.mrb[0].mxu0 %v1235
          %v1398 = vpop.f32.mrb[0].mxu0
          %v1399 = vadd.f32 %v1228, %v1398
          %v1400 = vpop.f32.mrb[0].mxu0
          %1401 = vmatprep.mubr.f32.mxu0 0.0
          %1402 = vmatmul.mubr.f32.gmra.mrb[0].mxu0 %v1238
          %v1403 = vpop.f32.mrb[0].mxu0
          %v1404 = vadd.f32 %v1228, %v1403
          %v1405 = vpop.f32.mrb[0].mxu0
          %1406 = vmatprep.mubr.f32.mxu0 0.0
          %1407 = vmatmul.mubr.f32.gmra.mrb[0].mxu0 %v1241
          %v1408 = vpop.f32.mrb[0].mxu0
          %v1409 = vadd.f32 %v1228, %v1408
          %v1410 = vpop.f32.mrb[0].mxu0
          %1411 = vmatprep.mubr.f32.mxu0 0.0
          %1412 = vmatmul.mubr.f32.gmra.mrb[0].mxu0 %v1244
          %v1413 = vpop.f32.mrb[0].mxu0
          %v1414 = vadd.f32 %v1228, %v1413
          %v1415 = vpop.f32.mrb[0].mxu0
          %1416 = vmatprep.mubr.f32.mxu0 0.0
          %1417 = vmatmul.mubr.f32.gmra.mrb[0].mxu0 %v1247
          %v1418 = vpop.f32.mrb[0].mxu0
          %v1419 = vadd.f32 %v1228, %v1418
          %v1420 = vpop.f32.mrb[0].mxu0
          %1421 = vmatprep.mubr.f32.mxu0 0.0
          %1422 = vmatmul.mubr.f32.gmra.mrb[0].mxu0 %v1250
          %v1423 = vpop.f32.mrb[0].mxu0
          %v1424 = vadd.f32 %v1228, %v1423
          %v1425 = vpop.f32.mrb[0].mxu0
          %1426 = vmatprep.mubr.f32.mxu0 0.0
          %1427 = vmatmul.mubr.f32.gmra.mrb[0].mxu0 %v1253
          %v1428 = vpop.f32.mrb[0].mxu0
          %v1429 = vadd.f32 %v1228, %v1428
          %v1430 = vpop.f32.mrb[0].mxu0
          %1431 = vmatprep.mubr.f32.mxu0 0.0
          %1432 = vmatmul.mubr.f32.gmra.mrb[0].mxu0 %v1256
          %v1433 = vpop.f32.mrb[0].mxu0
          %v1434 = vadd.f32 %v1228, %v1433
          %v1435 = vpop.f32.mrb[0].mxu0
          %1436 = vmatprep.mubr.f32.mxu0 0.0
          %1437 = vmatmul.mubr.f32.gmra.mrb[0].mxu0 %v1259
          %v1438 = vpop.f32.mrb[0].mxu0
          %v1439 = vadd.f32 %v1228, %v1438
          %v1440 = vpop.f32.mrb[0].mxu0
          %1441 = vmatprep.mubr.f32.mxu0 0.0
          %1442 = vmatmul.mubr.f32.gmra.mrb[0].mxu0 %v1262
          %v1443 = vpop.f32.mrb[0].mxu0
          %v1444 = vadd.f32 %v1228, %v1443
          %v1445 = vpop.f32.mrb[0].mxu0
          %1446 = vmatprep.mubr.f32.mxu0 0.0
          %1447 = vmatmul.mubr.f32.gmra.mrb[0].mxu0 %v1265
          %v1448 = vpop.f32.mrb[0].mxu0
          %v1449 = vadd.f32 %v1228, %v1448
          %v1450 = vpop.f32.mrb[0].mxu0
          %1451 = vmatprep.mubr.f32.mxu0 0.0
          %1452 = vmatmul.mubr.f32.gmra.mrb[0].mxu0 %v1268
          %v1453 = vpop.f32.mrb[0].mxu0
          %v1454 = vadd.f32 %v1228, %v1453
          %v1455 = vpop.f32.mrb[0].mxu0
          %1456 = vmatprep.mubr.f32.mxu0 0.0
          %1457 = vmatmul.mubr.f32.gmra.mrb[0].mxu0 %v1271
          %v1458 = vpop.f32.mrb[0].mxu0
          %v1459 = vadd.f32 %v1228, %v1458
          %v1460 = vpop.f32.mrb[0].mxu0
          %1461 = vmatprep.mubr.f32.mxu0 0.0
          %1462 = vmatmul.mubr.f32.gmra.mrb[0].mxu0 %v1274
          %v1463 = vpop.f32.mrb[0].mxu0
          %v1464 = vadd.f32 %v1228, %v1463
          %v1465 = vpop.f32.mrb[0].mxu0
          %1466 = vmatprep.mubr.f32.mxu0 0.0
          %1467 = vmatmul.mubr.f32.gmra.mrb[0].mxu0 %v1277
          %v1468 = vpop.f32.mrb[0].mxu0
          %v1469 = vadd.f32 %v1228, %v1468
          %v1470 = vpop.f32.mrb[0].mxu0
          %1471 = vmatprep.mubr.f32.mxu0 0.0
          %1472 = vmatmul.mubr.f32.gmra.mrb[0].mxu0 %v1280
          %v1473 = vpop.f32.mrb[0].mxu0
          %v1474 = vadd.f32 %v1228, %v1473
          %v1475 = vpop.f32.mrb[0].mxu0
          %1476 = vmatprep.mubr.f32.mxu0 0.0
          %1477 = vmatmul.mubr.f32.gmra.mrb[0].mxu0 %v1283
          %v1478 = vpop.f32.mrb[0].mxu0
          %v1479 = vadd.f32 %v1228, %v1478
          %v1480 = vpop.f32.mrb[0].mxu0
          %1481 = vmatprep.mubr.f32.mxu0 0.0
          %1482 = vmatmul.mubr.f32.gmra.mrb[0].mxu0 %v1286
          %v1483 = vpop.f32.mrb[0].mxu0
          %v1484 = vadd.f32 %v1228, %v1483
          %v1485 = vpop.f32.mrb[0].mxu0
          %1486 = vmatprep.mubr.f32.mxu0 0.0
          %1487 = vmatmul.mubr.f32.gmra.mrb[0].mxu0 %v1289
          %v1488 = vpop.f32.mrb[0].mxu0
          %v1489 = vadd.f32 %v1228, %v1488
          %v1490 = vpop.f32.mrb[0].mxu0
          %1491 = vmatprep.mubr.f32.mxu0 0.0
          %1492 = vmatmul.mubr.f32.gmra.mrb[0].mxu0 %v1292
          %v1493 = vpop.f32.mrb[0].mxu0
          %v1494 = vadd.f32 %v1228, %v1493
          %v1495 = vpop.f32.mrb[0].mxu0
          %1496 = vmatprep.mubr.f32.mxu0 0.0
          %1497 = vmatmul.mubr.f32.gmra.mrb[0].mxu0 %v1295
          %v1498 = vpop.f32.mrb[0].mxu0
          %v1499 = vadd.f32 %v1228, %v1498
          %v1500 = vpop.f32.mrb[0].mxu0
          %1501 = vmatprep.mubr.f32.mxu0 0.0
          %1502 = vmatmul.mubr.f32.gmra.mrb[0].mxu0 %v1298
          %v1503 = vpop.f32.mrb[0].mxu0
          %v1504 = vadd.f32 %v1228, %v1503
          %v1505 = vpop.f32.mrb[0].mxu0
          %1506 = vmatprep.mubr.f32.mxu0 0.0
          %1507 = vmatmul.mubr.f32.gmra.mrb[0].mxu0 %v1301
          %v1508 = vpop.f32.mrb[0].mxu0
          %v1509 = vadd.f32 %v1228, %v1508
          %v1510 = vpop.f32.mrb[0].mxu0
          %1511 = vmatprep.mubr.f32.mxu0 0.0
          %1512 = vmatmul.mubr.f32.gmra.mrb[0].mxu0 %v1304
          %v1513 = vpop.f32.mrb[0].mxu0
          %v1514 = vadd.f32 %v1228, %v1513
          %v1515 = vpop.f32.mrb[0].mxu0
          %1516 = vmatprep.mubr.f32.mxu0 0.0
          %1517 = vmatmul.mubr.f32.gmra.mrb[0].mxu0 %v1307
          %v1518 = vpop.f32.mrb[0].mxu0
          %v1519 = vadd.f32 %v1228, %v1518
          %v1520 = vpop.f32.mrb[0].mxu0
          %1521 = vmatprep.mubr.f32.mxu0 0.0
          %1522 = vmatmul.mubr.f32.gmra.mrb[0].mxu0 %v1310
          %v1523 = vpop.f32.mrb[0].mxu0
          %v1524 = vadd.f32 %v1228, %v1523
          %v1525 = vpop.f32.mrb[0].mxu0
          %1526 = vmatprep.mubr.f32.mxu0 0.0
          %1527 = vmatmul.mubr.f32.gmra.mrb[0].mxu0 %v1313
          %v1528 = vpop.f32.mrb[0].mxu0
          %v1529 = vadd.f32 %v1228, %v1528
          %v1530 = vpop.f32.mrb[0].mxu0
          %1531 = vmatprep.mubr.f32.mxu0 0.0
          %1532 = vmatmul.mubr.f32.gmra.mrb[0].mxu0 %v1316
          %v1533 = vpop.f32.mrb[0].mxu0
          %v1534 = vadd.f32 %v1228, %v1533
          %v1535 = vpop.f32.mrb[0].mxu0
          %1536 = vmatprep.mubr.f32.mxu0 0.0
          %1537 = vmatmul.mubr.f32.gmra.mrb[0].mxu0 %v1319
          %v1538 = vpop.f32.mrb[0].mxu0
          %v1539 = vadd.f32 %v1228, %v1538
          %v1540 = vpop.f32.mrb[0].mxu0
          %1541 = vmatprep.mubr.f32.mxu0 0.0
          %1542 = vmatmul.mubr.f32.gmra.mrb[0].mxu0 %v1322
          %v1543 = vpop.f32.mrb[0].mxu0
          %v1544 = vadd.f32 %v1228, %v1543
          %v1545 = vpop.f32.mrb[0].mxu0
          %1546 = vmatprep.mubr.f32.mxu0 0.0
          %1547 = vmatmul.mubr.f32.gmra.mrb[0].mxu0 %v1325
          %v1548 = vpop.f32.mrb[0].mxu0
          %v1549 = vadd.f32 %v1228, %v1548
          %v1550 = vpop.f32.mrb[0].mxu0
          %1551 = vdwg.mxu0
          %vm1552 = vcmask 130048
          %1553 = vst.msk [vmem:[%s336] sm:$0xff] %vm1552, %v1394
          %1554 = vst.msk [vmem:[%s336 + $0x8] sm:$0xff] %vm1552, %v1399
          %1555 = vst.msk [vmem:[%s336 + $0x10] sm:$0xff] %vm1552, %v1404
          %1556 = vst.msk [vmem:[%s336 + $0x18] sm:$0xff] %vm1552, %v1409
          %1557 = vst.msk [vmem:[%s336 + $0x20] sm:$0xff] %vm1552, %v1414
          %1558 = vst.msk [vmem:[%s336 + $0x28] sm:$0xff] %vm1552, %v1419
          %1559 = vst.msk [vmem:[%s336 + $0x30] sm:$0xff] %vm1552, %v1424
          %1560 = vst.msk [vmem:[%s336 + $0x38] sm:$0xff] %vm1552, %v1429
          %1561 = vst.msk [vmem:[%s336 + $0x40] sm:$0xff] %vm1552, %v1434
          %1562 = vst.msk [vmem:[%s336 + $0x48] sm:$0xff] %vm1552, %v1439
          %1563 = vst.msk [vmem:[%s336 + $0x50] sm:$0xff] %vm1552, %v1444
          %1564 = vst.msk [vmem:[%s336 + $0x58] sm:$0xff] %vm1552, %v1449
          %1565 = vst.msk [vmem:[%s336 + $0x60] sm:$0xff] %vm1552, %v1454
          %1566 = vst.msk [vmem:[%s336 + $0x68] sm:$0xff] %vm1552, %v1459
          %1567 = vst.msk [vmem:[%s336 + $0x70] sm:$0xff] %vm1552, %v1464
          %1568 = vst.msk [vmem:[%s336 + $0x78] sm:$0xff] %vm1552, %v1469
          %1569 = vst.msk [vmem:[%s336 + $0x80] sm:$0xff] %vm1552, %v1474
          %1570 = vst.msk [vmem:[%s336 + $0x88] sm:$0xff] %vm1552, %v1479
          %1571 = vst.msk [vmem:[%s336 + $0x90] sm:$0xff] %vm1552, %v1484
          %1572 = vst.msk [vmem:[%s336 + $0x98] sm:$0xff] %vm1552, %v1489
          %1573 = vst.msk [vmem:[%s336 + $0xa0] sm:$0xff] %vm1552, %v1494
          %1574 = vst.msk [vmem:[%s336 + $0xa8] sm:$0xff] %vm1552, %v1499
          %1575 = vst.msk [vmem:[%s336 + $0xb0] sm:$0xff] %vm1552, %v1504
          %1576 = vst.msk [vmem:[%s336 + $0xb8] sm:$0xff] %vm1552, %v1509
          %1577 = vst.msk [vmem:[%s336 + $0xc0] sm:$0xff] %vm1552, %v1514
          %1578 = vst.msk [vmem:[%s336 + $0xc8] sm:$0xff] %vm1552, %v1519
          %1579 = vst.msk [vmem:[%s336 + $0xd0] sm:$0xff] %vm1552, %v1524
          %1580 = vst.msk [vmem:[%s336 + $0xd8] sm:$0xff] %vm1552, %v1529
          %1581 = vst.msk [vmem:[%s336 + $0xe0] sm:$0xff] %vm1552, %v1534
          %1582 = vst.msk [vmem:[%s336 + $0xe8] sm:$0xff] %vm1552, %v1539
          %1583 = vst.msk [vmem:[%s336 + $0xf0] sm:$0xff] %vm1552, %v1544
          %1584 = vst.msk [vmem:[%s336 + $0xf8] sm:$0xff] %vm1552, %v1549
        $region60: #{tpu_custom_call.1} parent=47 // pred_fallthru
          _
        %s1585 = smul.u32 32, %s25
        %p1586 = scmp.lt.s32.totalorder %s1585, 63
        %s1587 = scalar_select %p1586, %s1585, 63
        %s1588 = smul.addr %s1587, 8
        %s1589 = scalar_lea.vmem %s7, %s1588
        // Predicated region
        $region61: #{tpu_custom_call.1} parent=47 // pred_check
          %p1590 = pneg %p210
        $region62: #{tpu_custom_call.1} parent=47 // pred_check_branch
          %1592 = sbr.rel (%p1590) target = $region64
        $region63: #{tpu_custom_call.1} parent=47 // pred_region
          %s1593 = smul.u32 32, %s25
        $region64: #{tpu_custom_call.1} parent=47 // pred_fallthru
          _
      $region48: #{tpu_custom_call.1} parent=5 // pred_fallthru
        _
      %p1594 = scmp.le.s32.totalorder 2, %s16
      // Predicated region
      $region65: #{tpu_custom_call.1} parent=5 // pred_check
        %p1595 = pneg %p1594
      $region66: #{tpu_custom_call.1} parent=5 // pred_check_branch
        %1597 = sbr.rel (%p1595) target = $region68
      $region67: #{tpu_custom_call.1} parent=5 // pred_region
        %s1598 = ssub.s32 %s16, 2
        // Predicated region
        $region69: #{tpu_custom_call.1} parent=67 // pred_check
          %p1599 = pneg %p216
        $region70: #{tpu_custom_call.1} parent=67 // pred_check_branch
          %1601 = sbr.rel (%p1599) target = $region72
        $region71: #{tpu_custom_call.1} parent=67 // pred_region
          %s1602 = smul.u32 32, %s27
          %p1603 = scmp.lt.s32.totalorder %s1602, 63
          %s1604 = scalar_select %p1603, %s1602, 63
          %s1605 = smul.addr %s1604, 8
          %s1606 = scalar_lea.vmem %s7, %s1605
        $region72: #{tpu_custom_call.1} parent=67 // pred_fallthru
          _
      $region68: #{tpu_custom_call.1} parent=5 // pred_fallthru
        _
    $region6: #{tpu_custom_call.1} parent=1 // loop_footer
      %s20 = sadd.s32 1, %s16
    $region7: #{tpu_custom_call.1} parent=1 // loop_footer_branch
      %15 = sbr.rel target = $region3
    $region8: #{tpu_custom_call.1} parent=1 // loop_exit
      _
    %1607 = vsyncpa [#allocation4], 1
    %s1608 = scalar_lea.sflag [#allocation4], 1
    %1609 = vsyncpa %s1608, 1

</llo_original>
